<compile_context>
chip_gen: v5e
topology: v5e:2x2
jax: 0.10.0
libtpu: 0.0.40
codegen_flags: <defaults>
</compile_context>

<pallas_src>
import jax
import jax.numpy as jnp
from jax.experimental import pallas as pl
from jax.experimental.pallas import tpu as pltpu

IN = 784        # 28*28 flattened input
H1 = 400        # hidden width
ZD = 20         # latent dim
MULV_PAD = 128  # lane-dense padded width for the fused mu||logvar output


def _round_up(n, m):
    return ((n + m - 1) // m) * m


def vae_kernel(x_ref, eps_ref,
               w1_ref, b1_ref,
               wq_ref, bq_ref,          # fused+padded fc21||fc22 head (f32): (H1,128), (1,128)
               w3_ref, b3_ref,
               w4_ref, b4_ref,
               recon_ref, mulv_ref):
    # x arrives f32 straight from HBM; cast to bf16 in VMEM (no extra HBM pass).
    x = x_ref[...].astype(jnp.bfloat16)          # (TB, 784)
    eps = eps_ref[...]                           # (TB, 20) f32

    # ---- encode ----
    h1 = jnp.dot(x, w1_ref[...], preferred_element_type=jnp.float32) + b1_ref[...]
    h1 = jnp.maximum(h1, 0.0)                    # relu, f32

    # tiny f32 mu/logvar head, lane-padded to 128: lanes [mu(20) | logvar(20) | zeros]
    mulv = jnp.dot(h1, wq_ref[...], preferred_element_type=jnp.float32) + bq_ref[...]
    mu = mulv[:, :ZD]
    logvar = mulv[:, ZD:2 * ZD]

    # ---- reparameterize (training mode): z = eps * exp(0.5*logvar) + mu ----
    z = eps * jnp.exp(0.5 * logvar) + mu

    # ---- decode ----
    h3 = jnp.dot(z.astype(jnp.bfloat16), w3_ref[...],
                 preferred_element_type=jnp.float32) + b3_ref[...]
    h3 = jnp.maximum(h3, 0.0)                    # relu, f32
    logits = jnp.dot(h3.astype(jnp.bfloat16), w4_ref[...],
                     preferred_element_type=jnp.float32) + b4_ref[...]

    recon_ref[...] = jax.nn.sigmoid(logits).astype(recon_ref.dtype)   # bf16 store
    mulv_ref[...] = mulv


def prepare_params(params):
    """One-time weight prep, hoisted out of the per-step forward path:
    bf16 matmul weights, fused + lane-padded (to 128) f32 mu/logvar head, f32 biases."""
    (w1, b1, w21, b21, w22, b22, w3, b3, w4, b4) = params
    wq = jnp.zeros((H1, MULV_PAD), jnp.float32)
    wq = wq.at[:, :ZD].set(w21.astype(jnp.float32))
    wq = wq.at[:, ZD:2 * ZD].set(w22.astype(jnp.float32))
    bq = jnp.zeros((1, MULV_PAD), jnp.float32)
    bq = bq.at[:, :ZD].set(b21.astype(jnp.float32))
    bq = bq.at[:, ZD:2 * ZD].set(b22.astype(jnp.float32))
    return (w1.astype(jnp.bfloat16), b1.astype(jnp.float32),
            wq, bq,
            w3.astype(jnp.bfloat16), b3.astype(jnp.float32),
            w4.astype(jnp.bfloat16), b4.astype(jnp.float32))


def vae_forward(x, eps, prepared_params, *, tb=1024):
    """x: (B,1,28,28) f32 NCHW. Returns (recon (B,784) bf16, mu (B,20) f32, logvar (B,20) f32)."""
    x_flat = x.reshape(-1, IN).astype(jnp.float32)   # torch's view(-1, 784); stays f32
    B = x_flat.shape[0]

    (w1b, b1, wq, bq, w3b, b3, w4b, b4) = prepared_params

    # Batch tile: large enough to amortize ~0.35us/step pipeline overhead, but
    # split so the grid has >=2 steps whenever possible (v7x megacore).
    if B <= tb:
        TB = _round_up(pl.cdiv(B, 2), 8) if B > 8 else _round_up(B, 8)
    else:
        TB = tb
    Bp = _round_up(B, TB)
    if Bp != B:
        x_flat = jnp.pad(x_flat, ((0, Bp - B), (0, 0)))
        eps = jnp.pad(eps, ((0, Bp - B), (0, 0)))
    eps = eps.astype(jnp.float32)

    grid = (Bp // TB,)

    def batch_spec(n):
        return pl.BlockSpec((TB, n), lambda i: (i, 0))

    def resident_spec(arr):
        # same block every grid step -> DMA'd once, VMEM-resident across iterations
        return pl.BlockSpec(arr.shape, lambda i: (0, 0))

    in_arrays = [x_flat, eps, w1b, b1, wq, bq, w3b, b3, w4b, b4]
    in_specs = [
        batch_spec(IN),
        batch_spec(ZD),
        resident_spec(w1b), resident_spec(b1),
        resident_spec(wq), resident_spec(bq),
        resident_spec(w3b), resident_spec(b3),
        resident_spec(w4b), resident_spec(b4),
    ]

    out_shape = (
        jax.ShapeDtypeStruct((Bp, IN), jnp.bfloat16),        # recon stored in bf16
        jax.ShapeDtypeStruct((Bp, MULV_PAD), jnp.float32),   # lane-dense mu||logvar||pad
    )
    out_specs = (
        pl.BlockSpec((TB, IN), lambda i: (i, 0)),
        pl.BlockSpec((TB, MULV_PAD), lambda i: (i, 0)),
    )

    # Advisory cost model for XLA's scheduler around the custom call.
    flops = 2 * Bp * (IN * H1 + H1 * 2 * ZD + ZD * H1 + H1 * IN)
    transcendentals = Bp * (IN + ZD)
    weight_bytes = ((IN * H1 + H1 * IN) * 2 + H1 * MULV_PAD * 4 + ZD * H1 * 2
                    + (H1 + MULV_PAD + H1 + IN) * 4)
    bytes_accessed = Bp * (IN * 4 + ZD * 4 + IN * 2 + MULV_PAD * 4) + weight_bytes

    recon, mulv = pl.pallas_call(
        vae_kernel,
        out_shape=out_shape,
        grid=grid,
        in_specs=in_specs,
        out_specs=out_specs,
        compiler_params=pltpu.CompilerParams(
            dimension_semantics=("parallel",),        # megacore sharding on v7x
            vmem_limit_bytes=48 * 1024 * 1024,        # > v5e's 16 MiB default, < v7x's 64 MiB phys
        ),
        cost_estimate=pl.CostEstimate(
            flops=flops,
            transcendentals=transcendentals,
            bytes_accessed=bytes_accessed),
    )(*in_arrays)

    recon = recon[:B]
    mu = mulv[:B, :ZD]
    logvar = mulv[:B, ZD:2 * ZD]
    return recon, mu, logvar


def init_params(key):
    ks = jax.random.split(key, 10)
    scale = 0.02

    def lin(kw, kb, fan_in, fan_out):
        w = (scale * jax.random.normal(kw, (fan_in, fan_out))).astype(jnp.float32)
        b = jnp.zeros((1, fan_out), jnp.float32)
        return w, b

    w1, b1 = lin(ks[0], ks[1], IN, H1)
    w21, b21 = lin(ks[2], ks[3], H1, ZD)
    w22, b22 = lin(ks[4], ks[5], H1, ZD)
    w3, b3 = lin(ks[6], ks[7], ZD, H1)
    w4, b4 = lin(ks[8], ks[9], H1, IN)
    return (w1, b1, w21, b21, w22, b22, w3, b3, w4, b4)


if __name__ == "__main__":
    key = jax.random.PRNGKey(0)
    k_params, k_x, k_eps = jax.random.split(key, 3)

    B = 8
    x = jax.random.uniform(k_x, (B, 1, 28, 28), dtype=jnp.float32)   # NCHW like torch
    eps = jax.random.normal(k_eps, (B, ZD), dtype=jnp.float32)       # deterministic noise
    params = init_params(k_params)

    # One-time weight prep, done outside the forward/step (hoisted per review).
    prepared = jax.block_until_ready(prepare_params(params))

    recon, mu, logvar = vae_forward(x, eps, prepared)
    jax.block_until_ready((recon, mu, logvar))

    # f32 reference (kernel uses bf16 matmul operands / bf16 recon store with
    # f32 accumulation, so tolerances are loosened accordingly)
    (w1, b1, w21, b21, w22, b22, w3, b3, w4, b4) = params
    xf = x.reshape(-1, IN)
    h1 = jnp.maximum(xf @ w1 + b1, 0.0)
    mu_r = h1 @ w21 + b21
    lv_r = h1 @ w22 + b22
    z = eps * jnp.exp(0.5 * lv_r) + mu_r
    h3 = jnp.maximum(z @ w3 + b3, 0.0)
    rec_r = jax.nn.sigmoid(h3 @ w4 + b4)

    assert recon.shape == (B, IN) and mu.shape == (B, ZD) and logvar.shape == (B, ZD)
    assert jnp.allclose(recon.astype(jnp.float32), rec_r, atol=3e-2, rtol=3e-2)
    assert jnp.allclose(mu, mu_r, atol=3e-2, rtol=3e-2)
    assert jnp.allclose(logvar, lv_r, atol=3e-2, rtol=3e-2)

    print("KERNEL_OK")
</pallas_src>

<mosaic_0001>
module attributes {stable_mosaic.version = 11 : i64} {
  func.func @vae_kernel(%arg0: i32, %arg1: memref<8x784xf32, #tpu.memory_space<vmem>>, %arg2: memref<8x20xf32, #tpu.memory_space<vmem>>, %arg3: memref<784x400xbf16, #tpu.memory_space<vmem>>, %arg4: memref<1x400xf32, #tpu.memory_space<vmem>>, %arg5: memref<400x128xf32, #tpu.memory_space<vmem>>, %arg6: memref<1x128xf32, #tpu.memory_space<vmem>>, %arg7: memref<20x400xbf16, #tpu.memory_space<vmem>>, %arg8: memref<1x400xf32, #tpu.memory_space<vmem>>, %arg9: memref<400x784xbf16, #tpu.memory_space<vmem>>, %arg10: memref<1x784xf32, #tpu.memory_space<vmem>>, %arg11: memref<8x784xbf16, #tpu.memory_space<vmem>>, %arg12: memref<8x128xf32, #tpu.memory_space<vmem>>) attributes {dimension_semantics = [#tpu.dimension_semantics<parallel>], iteration_bounds = array<i64: 1>, scalar_prefetch = 0 : i64, scratch_operands = 0 : i64, tpu.core_type = #tpu.core_type<tc>, window_params = [{transform_indices = @transform_0, window_bounds = array<i64: 8, 784>}, {transform_indices = @transform_1, window_bounds = array<i64: 8, 20>}, {pipeline_mode = #tpu.pipeline_mode<synchronous>, transform_indices = @transform_2, window_bounds = array<i64: 784, 400>}, {pipeline_mode = #tpu.pipeline_mode<synchronous>, transform_indices = @transform_3, window_bounds = array<i64: 1, 400>}, {pipeline_mode = #tpu.pipeline_mode<synchronous>, transform_indices = @transform_4, window_bounds = array<i64: 400, 128>}, {pipeline_mode = #tpu.pipeline_mode<synchronous>, transform_indices = @transform_5, window_bounds = array<i64: 1, 128>}, {pipeline_mode = #tpu.pipeline_mode<synchronous>, transform_indices = @transform_6, window_bounds = array<i64: 20, 400>}, {pipeline_mode = #tpu.pipeline_mode<synchronous>, transform_indices = @transform_7, window_bounds = array<i64: 1, 400>}, {pipeline_mode = #tpu.pipeline_mode<synchronous>, transform_indices = @transform_8, window_bounds = array<i64: 400, 784>}, {pipeline_mode = #tpu.pipeline_mode<synchronous>, transform_indices = @transform_9, window_bounds = array<i64: 1, 784>}, {transform_indices = @transform_10, window_bounds = array<i64: 8, 784>}, {transform_indices = @transform_11, window_bounds = array<i64: 8, 128>}]} {
    %c0 = arith.constant 0 : index
    %c0_0 = arith.constant 0 : index
    %0 = vector.load %arg1[%c0, %c0_0] : memref<8x784xf32, #tpu.memory_space<vmem>>, vector<8x784xf32>
    %1 = arith.truncf %0 : vector<8x784xf32> to vector<8x784xbf16>
    %c0_1 = arith.constant 0 : index
    %c0_2 = arith.constant 0 : index
    %2 = vector.load %arg2[%c0_1, %c0_2] : memref<8x20xf32, #tpu.memory_space<vmem>>, vector<8x20xf32>
    %c0_3 = arith.constant 0 : index
    %c0_4 = arith.constant 0 : index
    %3 = vector.load %arg3[%c0_3, %c0_4] : memref<784x400xbf16, #tpu.memory_space<vmem>>, vector<784x400xbf16>
    %cst = arith.constant dense<0.000000e+00> : vector<8x400xf32>
    %4 = tpu.matmul %1, %3, %cst {dimension_numbers = #tpu.dot_dimension_numbers<[1], [0], [0], [1], [0, 0, 1, 1], [], []>} : vector<8x784xbf16>, vector<784x400xbf16>, vector<8x400xf32> -> vector<8x400xf32>
    %c0_5 = arith.constant 0 : index
    %c0_6 = arith.constant 0 : index
    %5 = vector.load %arg4[%c0_5, %c0_6] : memref<1x400xf32, #tpu.memory_space<vmem>>, vector<1x400xf32>
    %6 = vector.broadcast %5 : vector<1x400xf32> to vector<8x400xf32>
    %7 = arith.addf %4, %6 : vector<8x400xf32>
    %cst_7 = arith.constant 0.000000e+00 : f32
    %8 = vector.broadcast %cst_7 : f32 to vector<8x400xf32>
    %9 = arith.maximumf %7, %8 : vector<8x400xf32>
    %c0_8 = arith.constant 0 : index
    %c0_9 = arith.constant 0 : index
    %10 = vector.load %arg5[%c0_8, %c0_9] : memref<400x128xf32, #tpu.memory_space<vmem>>, vector<400x128xf32>
    %cst_10 = arith.constant dense<0.000000e+00> : vector<8x128xf32>
    %11 = tpu.matmul %9, %10, %cst_10 {dimension_numbers = #tpu.dot_dimension_numbers<[1], [0], [0], [1], [0, 0, 1, 1], [], []>} : vector<8x400xf32>, vector<400x128xf32>, vector<8x128xf32> -> vector<8x128xf32>
    %c0_11 = arith.constant 0 : index
    %c0_12 = arith.constant 0 : index
    %12 = vector.load %arg6[%c0_11, %c0_12] : memref<1x128xf32, #tpu.memory_space<vmem>>, vector<1x128xf32>
    %13 = vector.broadcast %12 : vector<1x128xf32> to vector<8x128xf32>
    %14 = arith.addf %11, %13 : vector<8x128xf32>
    %15 = vector.extract_strided_slice %14 {offsets = [0, 0], sizes = [8, 20], strides = [1, 1]} : vector<8x128xf32> to vector<8x20xf32>
    %16 = vector.extract_strided_slice %14 {offsets = [0, 20], sizes = [8, 20], strides = [1, 1]} : vector<8x128xf32> to vector<8x20xf32>
    %cst_13 = arith.constant 5.000000e-01 : f32
    %17 = vector.broadcast %cst_13 : f32 to vector<8x20xf32>
    %18 = arith.mulf %17, %16 : vector<8x20xf32>
    %19 = math.exp %18 : vector<8x20xf32>
    %20 = arith.mulf %2, %19 : vector<8x20xf32>
    %21 = arith.addf %20, %15 : vector<8x20xf32>
    %22 = arith.truncf %21 : vector<8x20xf32> to vector<8x20xbf16>
    %c0_14 = arith.constant 0 : index
    %c0_15 = arith.constant 0 : index
    %23 = vector.load %arg7[%c0_14, %c0_15] : memref<20x400xbf16, #tpu.memory_space<vmem>>, vector<20x400xbf16>
    %cst_16 = arith.constant dense<0.000000e+00> : vector<8x400xf32>
    %24 = tpu.matmul %22, %23, %cst_16 {dimension_numbers = #tpu.dot_dimension_numbers<[1], [0], [0], [1], [0, 0, 1, 1], [], []>} : vector<8x20xbf16>, vector<20x400xbf16>, vector<8x400xf32> -> vector<8x400xf32>
    %c0_17 = arith.constant 0 : index
    %c0_18 = arith.constant 0 : index
    %25 = vector.load %arg8[%c0_17, %c0_18] : memref<1x400xf32, #tpu.memory_space<vmem>>, vector<1x400xf32>
    %26 = vector.broadcast %25 : vector<1x400xf32> to vector<8x400xf32>
    %27 = arith.addf %24, %26 : vector<8x400xf32>
    %cst_19 = arith.constant 0.000000e+00 : f32
    %28 = vector.broadcast %cst_19 : f32 to vector<8x400xf32>
    %29 = arith.maximumf %27, %28 : vector<8x400xf32>
    %30 = arith.truncf %29 : vector<8x400xf32> to vector<8x400xbf16>
    %c0_20 = arith.constant 0 : index
    %c0_21 = arith.constant 0 : index
    %31 = vector.load %arg9[%c0_20, %c0_21] : memref<400x784xbf16, #tpu.memory_space<vmem>>, vector<400x784xbf16>
    %cst_22 = arith.constant dense<0.000000e+00> : vector<8x784xf32>
    %32 = tpu.matmul %30, %31, %cst_22 {dimension_numbers = #tpu.dot_dimension_numbers<[1], [0], [0], [1], [0, 0, 1, 1], [], []>} : vector<8x400xbf16>, vector<400x784xbf16>, vector<8x784xf32> -> vector<8x784xf32>
    %c0_23 = arith.constant 0 : index
    %c0_24 = arith.constant 0 : index
    %33 = vector.load %arg10[%c0_23, %c0_24] : memref<1x784xf32, #tpu.memory_space<vmem>>, vector<1x784xf32>
    %34 = vector.broadcast %33 : vector<1x784xf32> to vector<8x784xf32>
    %35 = arith.addf %32, %34 : vector<8x784xf32>
    %36 = arith.negf %35 : vector<8x784xf32>
    %37 = math.exp %36 : vector<8x784xf32>
    %cst_25 = arith.constant 1.000000e+00 : f32
    %38 = vector.broadcast %cst_25 : f32 to vector<8x784xf32>
    %39 = arith.addf %38, %37 : vector<8x784xf32>
    %40 = arith.divf %38, %39 : vector<8x784xf32>
    %41 = arith.truncf %40 : vector<8x784xf32> to vector<8x784xbf16>
    %c0_26 = arith.constant 0 : index
    %c0_27 = arith.constant 0 : index
    %42 = vector.load %arg11[%c0_26, %c0_27] : memref<8x784xbf16, #tpu.memory_space<vmem>>, vector<8x784xbf16>
    tpu.vector_store %arg11[%c0_26, %c0_27], %41 {strides = array<i32>} : memref<8x784xbf16, #tpu.memory_space<vmem>>, vector<8x784xbf16>,
    %c0_28 = arith.constant 0 : index
    %c0_29 = arith.constant 0 : index
    %43 = vector.load %arg12[%c0_28, %c0_29] : memref<8x128xf32, #tpu.memory_space<vmem>>, vector<8x128xf32>
    tpu.vector_store %arg12[%c0_28, %c0_29], %14 {strides = array<i32>} : memref<8x128xf32, #tpu.memory_space<vmem>>, vector<8x128xf32>,
    return
  }
  func.func @transform_0(%arg0: i32) -> (i32, i32) {
    %c0_i32 = arith.constant 0 : i32
    %c0_i32_0 = arith.constant 0 : i32
    return %arg0, %c0_i32 : i32, i32
  }
  func.func @transform_1(%arg0: i32) -> (i32, i32) {
    %c0_i32 = arith.constant 0 : i32
    %c0_i32_0 = arith.constant 0 : i32
    return %arg0, %c0_i32 : i32, i32
  }
  func.func @transform_2(%arg0: i32) -> (i32, i32) {
    %c0_i32 = arith.constant 0 : i32
    %c0_i32_0 = arith.constant 0 : i32
    %c0_i32_1 = arith.constant 0 : i32
    return %c0_i32, %c0_i32_0 : i32, i32
  }
  func.func @transform_3(%arg0: i32) -> (i32, i32) {
    %c0_i32 = arith.constant 0 : i32
    %c0_i32_0 = arith.constant 0 : i32
    %c0_i32_1 = arith.constant 0 : i32
    return %c0_i32, %c0_i32_0 : i32, i32
  }
  func.func @transform_4(%arg0: i32) -> (i32, i32) {
    %c0_i32 = arith.constant 0 : i32
    %c0_i32_0 = arith.constant 0 : i32
    %c0_i32_1 = arith.constant 0 : i32
    return %c0_i32, %c0_i32_0 : i32, i32
  }
  func.func @transform_5(%arg0: i32) -> (i32, i32) {
    %c0_i32 = arith.constant 0 : i32
    %c0_i32_0 = arith.constant 0 : i32
    %c0_i32_1 = arith.constant 0 : i32
    return %c0_i32, %c0_i32_0 : i32, i32
  }
  func.func @transform_6(%arg0: i32) -> (i32, i32) {
    %c0_i32 = arith.constant 0 : i32
    %c0_i32_0 = arith.constant 0 : i32
    %c0_i32_1 = arith.constant 0 : i32
    return %c0_i32, %c0_i32_0 : i32, i32
  }
  func.func @transform_7(%arg0: i32) -> (i32, i32) {
    %c0_i32 = arith.constant 0 : i32
    %c0_i32_0 = arith.constant 0 : i32
    %c0_i32_1 = arith.constant 0 : i32
    return %c0_i32, %c0_i32_0 : i32, i32
  }
  func.func @transform_8(%arg0: i32) -> (i32, i32) {
    %c0_i32 = arith.constant 0 : i32
    %c0_i32_0 = arith.constant 0 : i32
    %c0_i32_1 = arith.constant 0 : i32
    return %c0_i32, %c0_i32_0 : i32, i32
  }
  func.func @transform_9(%arg0: i32) -> (i32, i32) {
    %c0_i32 = arith.constant 0 : i32
    %c0_i32_0 = arith.constant 0 : i32
    %c0_i32_1 = arith.constant 0 : i32
    return %c0_i32, %c0_i32_0 : i32, i32
  }
  func.func @transform_10(%arg0: i32) -> (i32, i32) {
    %c0_i32 = arith.constant 0 : i32
    %c0_i32_0 = arith.constant 0 : i32
    return %arg0, %c0_i32 : i32, i32
  }
  func.func @transform_11(%arg0: i32) -> (i32, i32) {
    %c0_i32 = arith.constant 0 : i32
    %c0_i32_0 = arith.constant 0 : i32
    return %arg0, %c0_i32 : i32, i32
  }
}

</mosaic_0001>

<llo_original>
// kernel: tpu_custom_call.1
$region0: #{tpu_custom_call.1}
  #allocation0 [shape = 'u32[]', space=smem, size = 0x4, offset = 0x4, fixed_abs, tag = 'smem constant byte address 0x4 - core index']
  #allocation1 [shape = 'u32[72,128]{1,0:T(1,128)}', space=vmem, size = 0x9000, scoped, tag = 'internal scratch']
  %s0 = inlined_call_operand.vmem [shape: f32[8,784], index: 0, kind: input, shape index: {}]
  %s1 = inlined_call_operand.vmem [shape: f32[8,20], index: 1, kind: input, shape index: {}]
  %s2 = inlined_call_operand.vmem [shape: bf16[784,400], index: 2, kind: input, shape index: {}]
  %s3 = inlined_call_operand.vmem [shape: f32[1,400], index: 3, kind: input, shape index: {}]
  %s4 = inlined_call_operand.vmem [shape: f32[400,128], index: 4, kind: input, shape index: {}]
  %s5 = inlined_call_operand.vmem [shape: f32[1,128], index: 5, kind: input, shape index: {}]
  %s6 = inlined_call_operand.vmem [shape: bf16[20,400], index: 6, kind: input, shape index: {}]
  %s7 = inlined_call_operand.vmem [shape: f32[1,400], index: 7, kind: input, shape index: {}]
  %s8 = inlined_call_operand.vmem [shape: bf16[400,784], index: 8, kind: input, shape index: {}]
  %s9 = inlined_call_operand.vmem [shape: f32[1,784], index: 9, kind: input, shape index: {}]
  %s10 = inlined_call_operand.hbm [shape: bf16[8,784], index: 10, kind: output, shape index: {0}]
  %s11 = inlined_call_operand.hbm [shape: f32[8,128], index: 11, kind: output, shape index: {1}]
  %12 = xla_tuple %s10, %s11
  %s13 = sld [smem:[#allocation0]]
  $region58: #{tpu_custom_call.1} parent=0
    _
  %s15 = ssub.s32 1, %s13
  %s16 = scalar_select 0, %s15, %s13
  $region1: #{tpu_custom_call.1} parent=0
    #allocation2 [shape = 'u8[14336]{0}', space=vmem, size = 0x3800, scoped, tag = 'output window, operand 0, single buffered']
    #allocation3 [shape = 's32[1]{0}', space=sflag, size = 0x4, scoped, tag = 'scoped memory for tpu_custom_call.1']
    #allocation4 [shape = 'u8[4096]{0}', space=vmem, size = 0x1000, scoped, tag = 'output window, operand 1, single buffered']
    #allocation5 [shape = 's32[1]{0}', space=sflag, size = 0x4, scoped, tag = 'scoped memory for tpu_custom_call.1']
    %17 = vsyncpa [#allocation3], 0
    %18 = vsyncpa [#allocation5], 0
    // Predicated region
    $region2: #{tpu_custom_call.1} parent=1 // pred_check
      _
    $region3: #{tpu_custom_call.1} parent=1 // pred_check_branch
      %20 = sbr.rel (0) target = $region5
    $region4: #{tpu_custom_call.1} parent=1 // pred_region
      _
    $region5: #{tpu_custom_call.1} parent=1 // pred_fallthru
      _
    // Predicated region
    $region6: #{tpu_custom_call.1} parent=1 // pred_check
      _
    $region7: #{tpu_custom_call.1} parent=1 // pred_check_branch
      %22 = sbr.rel (0) target = $region9
    $region8: #{tpu_custom_call.1} parent=1 // pred_region
      _
    $region9: #{tpu_custom_call.1} parent=1 // pred_fallthru
      _
    // Predicated region
    $region10: #{tpu_custom_call.1} parent=1 // pred_check
      _
    $region11: #{tpu_custom_call.1} parent=1 // pred_check_branch
      %24 = sbr.rel (0) target = $region13
    $region12: #{tpu_custom_call.1} parent=1 // pred_region
      _
    $region13: #{tpu_custom_call.1} parent=1 // pred_fallthru
      _
    // Predicated region
    $region14: #{tpu_custom_call.1} parent=1 // pred_check
      _
    $region15: #{tpu_custom_call.1} parent=1 // pred_check_branch
      %26 = sbr.rel (0) target = $region17
    $region16: #{tpu_custom_call.1} parent=1 // pred_region
      _
    $region17: #{tpu_custom_call.1} parent=1 // pred_fallthru
      _
    // Predicated region
    $region18: #{tpu_custom_call.1} parent=1 // pred_check
      _
    $region19: #{tpu_custom_call.1} parent=1 // pred_check_branch
      %28 = sbr.rel (0) target = $region21
    $region20: #{tpu_custom_call.1} parent=1 // pred_region
      _
    $region21: #{tpu_custom_call.1} parent=1 // pred_fallthru
      _
    // Predicated region
    $region22: #{tpu_custom_call.1} parent=1 // pred_check
      _
    $region23: #{tpu_custom_call.1} parent=1 // pred_check_branch
      %30 = sbr.rel (0) target = $region25
    $region24: #{tpu_custom_call.1} parent=1 // pred_region
      _
    $region25: #{tpu_custom_call.1} parent=1 // pred_fallthru
      _
    // Predicated region
    $region26: #{tpu_custom_call.1} parent=1 // pred_check
      _
    $region27: #{tpu_custom_call.1} parent=1 // pred_check_branch
      %32 = sbr.rel (0) target = $region29
    $region28: #{tpu_custom_call.1} parent=1 // pred_region
      _
    $region29: #{tpu_custom_call.1} parent=1 // pred_fallthru
      _
    // Predicated region
    $region30: #{tpu_custom_call.1} parent=1 // pred_check
      _
    $region31: #{tpu_custom_call.1} parent=1 // pred_check_branch
      %34 = sbr.rel (0) target = $region33
    $region32: #{tpu_custom_call.1} parent=1 // pred_region
      _
    $region33: #{tpu_custom_call.1} parent=1 // pred_fallthru
      _
    // Predicated region
    $region34: #{tpu_custom_call.1} parent=1 // pred_check
      _
    $region35: #{tpu_custom_call.1} parent=1 // pred_check_branch
      %36 = sbr.rel (0) target = $region37
    $region36: #{tpu_custom_call.1} parent=1 // pred_region
      _
    $region37: #{tpu_custom_call.1} parent=1 // pred_fallthru
      _
    // Predicated region
    $region38: #{tpu_custom_call.1} parent=1 // pred_check
      _
    $region39: #{tpu_custom_call.1} parent=1 // pred_check_branch
      %38 = sbr.rel (0) target = $region41
    $region40: #{tpu_custom_call.1} parent=1 // pred_region
      _
    $region41: #{tpu_custom_call.1} parent=1 // pred_fallthru
      _
    %v40 = vld [vmem:[%s0] sm:$0xff]
    %v41 = vld [vmem:[%s0 + $0x8] sm:$0xff]
    %v42 = vld [vmem:[%s0 + $0x10] sm:$0xff]
    %v43 = vld [vmem:[%s0 + $0x18] sm:$0xff]
    %v44 = vld [vmem:[%s0 + $0x20] sm:$0xff]
    %v45 = vld [vmem:[%s0 + $0x28] sm:$0xff]
    %v46 = vld [vmem:[%s0 + $0x30] sm:$0xff]
    %v47 = vpack.c.bf16 %v40, %v40
    %v48 = vpack.c.bf16 %v41, %v41
    %v49 = vpack.c.bf16 %v42, %v42
    %v50 = vpack.c.bf16 %v43, %v43
    %v51 = vpack.c.bf16 %v44, %v44
    %v52 = vpack.c.bf16 %v45, %v45
    %v53 = vpack.c.bf16 %v46, %v46
    %v54 = vld [vmem:[%s1] sm:$0xff]
    %v55 = vld [vmem:[%s2] sm:$0xff]
    %v56 = vld [vmem:[%s2 + $0x8] sm:$0xff]
    %v57 = vld [vmem:[%s2 + $0x10] sm:$0xff]
    %v58 = vld [vmem:[%s2 + $0x18] sm:$0xff]
    %v59 = vld [vmem:[%s2 + $0x20] sm:$0xff]
    %v60 = vld [vmem:[%s2 + $0x28] sm:$0xff]
    %v61 = vld [vmem:[%s2 + $0x30] sm:$0xff]
    %v62 = vld [vmem:[%s2 + $0x38] sm:$0xff]
    %v63 = vld [vmem:[%s2 + $0x40] sm:$0xff]
    %v64 = vld [vmem:[%s2 + $0x48] sm:$0xff]
    %v65 = vld [vmem:[%s2 + $0x50] sm:$0xff]
    %v66 = vld [vmem:[%s2 + $0x58] sm:$0xff]
    %v67 = vld [vmem:[%s2 + $0x60] sm:$0xff]
    %v68 = vld [vmem:[%s2 + $0x68] sm:$0xff]
    %v69 = vld [vmem:[%s2 + $0x70] sm:$0xff]
    %v70 = vld [vmem:[%s2 + $0x78] sm:$0xff]
    %v71 = vld [vmem:[%s2 + $0x80] sm:$0xff]
    %v72 = vld [vmem:[%s2 + $0x88] sm:$0xff]
    %v73 = vld [vmem:[%s2 + $0x90] sm:$0xff]
    %v74 = vld [vmem:[%s2 + $0x98] sm:$0xff]
    %v75 = vld [vmem:[%s2 + $0xa0] sm:$0xff]
    %v76 = vld [vmem:[%s2 + $0xa8] sm:$0xff]
    %v77 = vld [vmem:[%s2 + $0xb0] sm:$0xff]
    %v78 = vld [vmem:[%s2 + $0xb8] sm:$0xff]
    %v79 = vld [vmem:[%s2 + $0xc0] sm:$0xff]
    %v80 = vld [vmem:[%s2 + $0xc8] sm:$0xff]
    %v81 = vld [vmem:[%s2 + $0xd0] sm:$0xff]
    %v82 = vld [vmem:[%s2 + $0xd8] sm:$0xff]
    %v83 = vld [vmem:[%s2 + $0xe0] sm:$0xff]
    %v84 = vld [vmem:[%s2 + $0xe8] sm:$0xff]
    %v85 = vld [vmem:[%s2 + $0xf0] sm:$0xff]
    %v86 = vld [vmem:[%s2 + $0xf8] sm:$0xff]
    %v87 = vld [vmem:[%s2 + $0x100] sm:$0xff]
    %v88 = vld [vmem:[%s2 + $0x108] sm:$0xff]
    %v89 = vld [vmem:[%s2 + $0x110] sm:$0xff]
    %v90 = vld [vmem:[%s2 + $0x118] sm:$0xff]
    %v91 = vld [vmem:[%s2 + $0x120] sm:$0xff]
    %v92 = vld [vmem:[%s2 + $0x128] sm:$0xff]
    %v93 = vld [vmem:[%s2 + $0x130] sm:$0xff]
    %v94 = vld [vmem:[%s2 + $0x138] sm:$0xff]
    %v95 = vld [vmem:[%s2 + $0x140] sm:$0xff]
    %v96 = vld [vmem:[%s2 + $0x148] sm:$0xff]
    %v97 = vld [vmem:[%s2 + $0x150] sm:$0xff]
    %v98 = vld [vmem:[%s2 + $0x158] sm:$0xff]
    %v99 = vld [vmem:[%s2 + $0x160] sm:$0xff]
    %v100 = vld [vmem:[%s2 + $0x168] sm:$0xff]
    %v101 = vld [vmem:[%s2 + $0x170] sm:$0xff]
    %v102 = vld [vmem:[%s2 + $0x178] sm:$0xff]
    %v103 = vld [vmem:[%s2 + $0x180] sm:$0xff]
    %v104 = vld [vmem:[%s2 + $0x188] sm:$0xff]
    %v105 = vld [vmem:[%s2 + $0x190] sm:$0xff]
    %v106 = vld [vmem:[%s2 + $0x198] sm:$0xff]
    %v107 = vld [vmem:[%s2 + $0x1a0] sm:$0xff]
    %v108 = vld [vmem:[%s2 + $0x1a8] sm:$0xff]
    %v109 = vld [vmem:[%s2 + $0x1b0] sm:$0xff]
    %v110 = vld [vmem:[%s2 + $0x1b8] sm:$0xff]
    %v111 = vld [vmem:[%s2 + $0x1c0] sm:$0xff]
    %v112 = vld [vmem:[%s2 + $0x1c8] sm:$0xff]
    %v113 = vld [vmem:[%s2 + $0x1d0] sm:$0xff]
    %v114 = vld [vmem:[%s2 + $0x1d8] sm:$0xff]
    %v115 = vld [vmem:[%s2 + $0x1e0] sm:$0xff]
    %v116 = vld [vmem:[%s2 + $0x1e8] sm:$0xff]
    %v117 = vld [vmem:[%s2 + $0x1f0] sm:$0xff]
    %v118 = vld [vmem:[%s2 + $0x1f8] sm:$0xff]
    %v119 = vld [vmem:[%s2 + $0x200] sm:$0xff]
    %v120 = vld [vmem:[%s2 + $0x208] sm:$0xff]
    %v121 = vld [vmem:[%s2 + $0x210] sm:$0xff]
    %v122 = vld [vmem:[%s2 + $0x218] sm:$0xff]
    %v123 = vld [vmem:[%s2 + $0x220] sm:$0xff]
    %v124 = vld [vmem:[%s2 + $0x228] sm:$0xff]
    %v125 = vld [vmem:[%s2 + $0x230] sm:$0xff]
    %v126 = vld [vmem:[%s2 + $0x238] sm:$0xff]
    %v127 = vld [vmem:[%s2 + $0x240] sm:$0xff]
    %v128 = vld [vmem:[%s2 + $0x248] sm:$0xff]
    %v129 = vld [vmem:[%s2 + $0x250] sm:$0xff]
    %v130 = vld [vmem:[%s2 + $0x258] sm:$0xff]
    %v131 = vld [vmem:[%s2 + $0x260] sm:$0xff]
    %v132 = vld [vmem:[%s2 + $0x268] sm:$0xff]
    %v133 = vld [vmem:[%s2 + $0x270] sm:$0xff]
    %v134 = vld [vmem:[%s2 + $0x278] sm:$0xff]
    %v135 = vld [vmem:[%s2 + $0x280] sm:$0xff]
    %v136 = vld [vmem:[%s2 + $0x288] sm:$0xff]
    %v137 = vld [vmem:[%s2 + $0x290] sm:$0xff]
    %v138 = vld [vmem:[%s2 + $0x298] sm:$0xff]
    %v139 = vld [vmem:[%s2 + $0x2a0] sm:$0xff]
    %v140 = vld [vmem:[%s2 + $0x2a8] sm:$0xff]
    %v141 = vld [vmem:[%s2 + $0x2b0] sm:$0xff]
    %v142 = vld [vmem:[%s2 + $0x2b8] sm:$0xff]
    %v143 = vld [vmem:[%s2 + $0x2c0] sm:$0xff]
    %v144 = vld [vmem:[%s2 + $0x2c8] sm:$0xff]
    %v145 = vld [vmem:[%s2 + $0x2d0] sm:$0xff]
    %v146 = vld [vmem:[%s2 + $0x2d8] sm:$0xff]
    %v147 = vld [vmem:[%s2 + $0x2e0] sm:$0xff]
    %v148 = vld [vmem:[%s2 + $0x2e8] sm:$0xff]
    %v149 = vld [vmem:[%s2 + $0x2f0] sm:$0xff]
    %v150 = vld [vmem:[%s2 + $0x2f8] sm:$0xff]
    %v151 = vld [vmem:[%s2 + $0x300] sm:$0xff]
    %v152 = vld [vmem:[%s2 + $0x308] sm:$0xff]
    %v153 = vld [vmem:[%s2 + $0x310] sm:$0xff]
    %v154 = vld [vmem:[%s2 + $0x318] sm:$0xff]
    %v155 = vld [vmem:[%s2 + $0x320] sm:$0xff]
    %v156 = vld [vmem:[%s2 + $0x328] sm:$0xff]
    %v157 = vld [vmem:[%s2 + $0x330] sm:$0xff]
    %v158 = vld [vmem:[%s2 + $0x338] sm:$0xff]
    %v159 = vld [vmem:[%s2 + $0x340] sm:$0xff]
    %v160 = vld [vmem:[%s2 + $0x348] sm:$0xff]
    %v161 = vld [vmem:[%s2 + $0x350] sm:$0xff]
    %v162 = vld [vmem:[%s2 + $0x358] sm:$0xff]
    %v163 = vld [vmem:[%s2 + $0x360] sm:$0xff]
    %v164 = vld [vmem:[%s2 + $0x368] sm:$0xff]
    %v165 = vld [vmem:[%s2 + $0x370] sm:$0xff]
    %v166 = vld [vmem:[%s2 + $0x378] sm:$0xff]
    %v167 = vld [vmem:[%s2 + $0x380] sm:$0xff]
    %v168 = vld [vmem:[%s2 + $0x388] sm:$0xff]
    %v169 = vld [vmem:[%s2 + $0x390] sm:$0xff]
    %v170 = vld [vmem:[%s2 + $0x398] sm:$0xff]
    %v171 = vld [vmem:[%s2 + $0x3a0] sm:$0xff]
    %v172 = vld [vmem:[%s2 + $0x3a8] sm:$0xff]
    %v173 = vld [vmem:[%s2 + $0x3b0] sm:$0xff]
    %v174 = vld [vmem:[%s2 + $0x3b8] sm:$0xff]
    %v175 = vld [vmem:[%s2 + $0x3c0] sm:$0xff]
    %v176 = vld [vmem:[%s2 + $0x3c8] sm:$0xff]
    %v177 = vld [vmem:[%s2 + $0x3d0] sm:$0xff]
    %v178 = vld [vmem:[%s2 + $0x3d8] sm:$0xff]
    %v179 = vld [vmem:[%s2 + $0x3e0] sm:$0xff]
    %v180 = vld [vmem:[%s2 + $0x3e8] sm:$0xff]
    %v181 = vld [vmem:[%s2 + $0x3f0] sm:$0xff]
    %v182 = vld [vmem:[%s2 + $0x3f8] sm:$0xff]
    %v183 = vld [vmem:[%s2 + $0x400] sm:$0xff]
    %v184 = vld [vmem:[%s2 + $0x408] sm:$0xff]
    %v185 = vld [vmem:[%s2 + $0x410] sm:$0xff]
    %v186 = vld [vmem:[%s2 + $0x418] sm:$0xff]
    %v187 = vld [vmem:[%s2 + $0x420] sm:$0xff]
    %v188 = vld [vmem:[%s2 + $0x428] sm:$0xff]
    %v189 = vld [vmem:[%s2 + $0x430] sm:$0xff]
    %v190 = vld [vmem:[%s2 + $0x438] sm:$0xff]
    %v191 = vld [vmem:[%s2 + $0x440] sm:$0xff]
    %v192 = vld [vmem:[%s2 + $0x448] sm:$0xff]
    %v193 = vld [vmem:[%s2 + $0x450] sm:$0xff]
    %v194 = vld [vmem:[%s2 + $0x458] sm:$0xff]
    %v195 = vld [vmem:[%s2 + $0x460] sm:$0xff]
    %v196 = vld [vmem:[%s2 + $0x468] sm:$0xff]
    %v197 = vld [vmem:[%s2 + $0x470] sm:$0xff]
    %v198 = vld [vmem:[%s2 + $0x478] sm:$0xff]
    %v199 = vld [vmem:[%s2 + $0x480] sm:$0xff]
    %v200 = vld [vmem:[%s2 + $0x488] sm:$0xff]
    %v201 = vld [vmem:[%s2 + $0x490] sm:$0xff]
    %v202 = vld [vmem:[%s2 + $0x498] sm:$0xff]
    %v203 = vld [vmem:[%s2 + $0x4a0] sm:$0xff]
    %v204 = vld [vmem:[%s2 + $0x4a8] sm:$0xff]
    %v205 = vld [vmem:[%s2 + $0x4b0] sm:$0xff]
    %v206 = vld [vmem:[%s2 + $0x4b8] sm:$0xff]
    %v207 = vld [vmem:[%s2 + $0x4c0] sm:$0xff]
    %v208 = vld [vmem:[%s2 + $0x4c8] sm:$0xff]
    %v209 = vld [vmem:[%s2 + $0x4d0] sm:$0xff]
    %v210 = vld [vmem:[%s2 + $0x4d8] sm:$0xff]
    %v211 = vld [vmem:[%s2 + $0x4e0] sm:$0xff]
    %v212 = vld [vmem:[%s2 + $0x4e8] sm:$0xff]
    %v213 = vld [vmem:[%s2 + $0x4f0] sm:$0xff]
    %v214 = vld [vmem:[%s2 + $0x4f8] sm:$0xff]
    %v215 = vld [vmem:[%s2 + $0x500] sm:$0xff]
    %v216 = vld [vmem:[%s2 + $0x508] sm:$0xff]
    %v217 = vld [vmem:[%s2 + $0x510] sm:$0xff]
    %v218 = vld [vmem:[%s2 + $0x518] sm:$0xff]
    %v219 = vld [vmem:[%s2 + $0x520] sm:$0xff]
    %v220 = vld [vmem:[%s2 + $0x528] sm:$0xff]
    %v221 = vld [vmem:[%s2 + $0x530] sm:$0xff]
    %v222 = vld [vmem:[%s2 + $0x538] sm:$0xff]
    %v223 = vld [vmem:[%s2 + $0x540] sm:$0xff]
    %v224 = vld [vmem:[%s2 + $0x548] sm:$0xff]
    %v225 = vld [vmem:[%s2 + $0x550] sm:$0xff]
    %v226 = vld [vmem:[%s2 + $0x558] sm:$0xff]
    %v227 = vld [vmem:[%s2 + $0x560] sm:$0xff]
    %v228 = vld [vmem:[%s2 + $0x568] sm:$0xff]
    %v229 = vld [vmem:[%s2 + $0x570] sm:$0xff]
    %v230 = vld [vmem:[%s2 + $0x578] sm:$0xff]
    %v231 = vld [vmem:[%s2 + $0x580] sm:$0xff]
    %v232 = vld [vmem:[%s2 + $0x588] sm:$0xff]
    %v233 = vld [vmem:[%s2 + $0x590] sm:$0xff]
    %v234 = vld [vmem:[%s2 + $0x598] sm:$0xff]
    %v235 = vld [vmem:[%s2 + $0x5a0] sm:$0xff]
    %v236 = vld [vmem:[%s2 + $0x5a8] sm:$0xff]
    %v237 = vld [vmem:[%s2 + $0x5b0] sm:$0xff]
    %v238 = vld [vmem:[%s2 + $0x5b8] sm:$0xff]
    %v239 = vld [vmem:[%s2 + $0x5c0] sm:$0xff]
    %v240 = vld [vmem:[%s2 + $0x5c8] sm:$0xff]
    %v241 = vld [vmem:[%s2 + $0x5d0] sm:$0xff]
    %v242 = vld [vmem:[%s2 + $0x5d8] sm:$0xff]
    %v243 = vld [vmem:[%s2 + $0x5e0] sm:$0xff]
    %v244 = vld [vmem:[%s2 + $0x5e8] sm:$0xff]
    %v245 = vld [vmem:[%s2 + $0x5f0] sm:$0xff]
    %v246 = vld [vmem:[%s2 + $0x5f8] sm:$0xff]
    %v247 = vld [vmem:[%s2 + $0x600] sm:$0xff]
    %v248 = vld [vmem:[%s2 + $0x608] sm:$0xff]
    %v249 = vld [vmem:[%s2 + $0x610] sm:$0xff]
    %v250 = vld [vmem:[%s2 + $0x618] sm:$0xff]
    %v251 = vld [vmem:[%s3] sm:$0xf]
    %v253 = vperm.slane %v251, 0
    %v254 = vperm.slane %v251, 1
    %v255 = vperm.slane %v251, 2
    %v256 = vperm.slane %v251, 3
    %v457 = vunpack.c.l.b16 %v55
    %v458 = vunpack.c.h.b16 %v55
    %v459 = vunpack.c.l.b16 %v56
    %v460 = vunpack.c.h.b16 %v56
    %v461 = vunpack.c.l.b16 %v57
    %v462 = vunpack.c.h.b16 %v57
    %v463 = vunpack.c.l.b16 %v58
    %v464 = vunpack.c.h.b16 %v58
    %v465 = vunpack.c.l.b16 %v59
    %v466 = vunpack.c.h.b16 %v59
    %v467 = vunpack.c.l.b16 %v60
    %v468 = vunpack.c.h.b16 %v60
    %v469 = vunpack.c.l.b16 %v61
    %v470 = vunpack.c.h.b16 %v61
    %v471 = vunpack.c.l.b16 %v62
    %v472 = vunpack.c.h.b16 %v62
    %v473 = vunpack.c.l.b16 %v63
    %v474 = vunpack.c.h.b16 %v63
    %v475 = vunpack.c.l.b16 %v64
    %v476 = vunpack.c.h.b16 %v64
    %v477 = vunpack.c.l.b16 %v65
    %v478 = vunpack.c.h.b16 %v65
    %v479 = vunpack.c.l.b16 %v66
    %v480 = vunpack.c.h.b16 %v66
    %v481 = vunpack.c.l.b16 %v67
    %v482 = vunpack.c.h.b16 %v67
    %v483 = vunpack.c.l.b16 %v68
    %v484 = vunpack.c.h.b16 %v68
    %v485 = vunpack.c.l.b16 %v69
    %v486 = vunpack.c.h.b16 %v69
    %v487 = vunpack.c.l.b16 %v70
    %v488 = vunpack.c.h.b16 %v70
    %v489 = vunpack.c.l.b16 %v71
    %v490 = vunpack.c.h.b16 %v71
    %v491 = vunpack.c.l.b16 %v72
    %v492 = vunpack.c.h.b16 %v72
    %v493 = vunpack.c.l.b16 %v73
    %v494 = vunpack.c.h.b16 %v73
    %v495 = vunpack.c.l.b16 %v74
    %v496 = vunpack.c.h.b16 %v74
    %v497 = vunpack.c.l.b16 %v75
    %v498 = vunpack.c.h.b16 %v75
    %v499 = vunpack.c.l.b16 %v76
    %v500 = vunpack.c.h.b16 %v76
    %v501 = vunpack.c.l.b16 %v77
    %v502 = vunpack.c.h.b16 %v77
    %v503 = vunpack.c.l.b16 %v78
    %v504 = vunpack.c.h.b16 %v78
    %v505 = vunpack.c.l.b16 %v79
    %v506 = vunpack.c.h.b16 %v79
    %v507 = vunpack.c.l.b16 %v80
    %v508 = vunpack.c.h.b16 %v80
    %v509 = vunpack.c.l.b16 %v81
    %v510 = vunpack.c.h.b16 %v81
    %v511 = vunpack.c.l.b16 %v82
    %v512 = vunpack.c.h.b16 %v82
    %v513 = vunpack.c.l.b16 %v83
    %v514 = vunpack.c.h.b16 %v83
    %v515 = vunpack.c.l.b16 %v84
    %v516 = vunpack.c.h.b16 %v84
    %v517 = vunpack.c.l.b16 %v85
    %v518 = vunpack.c.h.b16 %v85
    %v519 = vunpack.c.l.b16 %v86
    %v520 = vunpack.c.h.b16 %v86
    %v521 = vunpack.c.l.b16 %v87
    %v522 = vunpack.c.h.b16 %v87
    %v523 = vunpack.c.l.b16 %v88
    %v524 = vunpack.c.h.b16 %v88
    %v525 = vunpack.c.l.b16 %v89
    %v526 = vunpack.c.h.b16 %v89
    %v527 = vunpack.c.l.b16 %v90
    %v528 = vunpack.c.h.b16 %v90
    %v529 = vunpack.c.l.b16 %v91
    %v530 = vunpack.c.h.b16 %v91
    %v531 = vunpack.c.l.b16 %v92
    %v532 = vunpack.c.h.b16 %v92
    %v533 = vunpack.c.l.b16 %v93
    %v534 = vunpack.c.h.b16 %v93
    %v535 = vunpack.c.l.b16 %v94
    %v536 = vunpack.c.h.b16 %v94
    %v537 = vunpack.c.l.b16 %v95
    %v538 = vunpack.c.h.b16 %v95
    %v539 = vunpack.c.l.b16 %v96
    %v540 = vunpack.c.h.b16 %v96
    %v541 = vunpack.c.l.b16 %v97
    %v542 = vunpack.c.h.b16 %v97
    %v543 = vunpack.c.l.b16 %v98
    %v544 = vunpack.c.h.b16 %v98
    %v545 = vunpack.c.l.b16 %v99
    %v546 = vunpack.c.h.b16 %v99
    %v547 = vunpack.c.l.b16 %v100
    %v548 = vunpack.c.h.b16 %v100
    %v549 = vunpack.c.l.b16 %v101
    %v550 = vunpack.c.h.b16 %v101
    %v551 = vunpack.c.l.b16 %v102
    %v552 = vunpack.c.h.b16 %v102
    %v553 = vunpack.c.l.b16 %v103
    %v554 = vunpack.c.h.b16 %v103
    %v555 = vunpack.c.l.b16 %v104
    %v556 = vunpack.c.h.b16 %v104
    %v557 = vunpack.c.l.b16 %v105
    %v558 = vunpack.c.h.b16 %v105
    %v559 = vunpack.c.l.b16 %v106
    %v560 = vunpack.c.h.b16 %v106
    %v561 = vunpack.c.l.b16 %v107
    %v562 = vunpack.c.h.b16 %v107
    %v563 = vunpack.c.l.b16 %v108
    %v564 = vunpack.c.h.b16 %v108
    %v565 = vunpack.c.l.b16 %v109
    %v566 = vunpack.c.h.b16 %v109
    %v567 = vunpack.c.l.b16 %v110
    %v568 = vunpack.c.h.b16 %v110
    %v569 = vunpack.c.l.b16 %v111
    %v570 = vunpack.c.h.b16 %v111
    %v571 = vunpack.c.l.b16 %v112
    %v572 = vunpack.c.h.b16 %v112
    %v573 = vunpack.c.l.b16 %v113
    %v574 = vunpack.c.h.b16 %v113
    %v575 = vunpack.c.l.b16 %v114
    %v576 = vunpack.c.h.b16 %v114
    %v577 = vunpack.c.l.b16 %v115
    %v578 = vunpack.c.h.b16 %v115
    %v579 = vunpack.c.l.b16 %v116
    %v580 = vunpack.c.h.b16 %v116
    %v581 = vunpack.c.l.b16 %v117
    %v582 = vunpack.c.h.b16 %v117
    %v583 = vunpack.c.l.b16 %v118
    %v584 = vunpack.c.h.b16 %v118
    %v585 = vunpack.c.l.b16 %v119
    %v586 = vunpack.c.h.b16 %v119
    %v587 = vunpack.c.l.b16 %v120
    %v588 = vunpack.c.h.b16 %v120
    %v589 = vunpack.c.l.b16 %v121
    %v590 = vunpack.c.h.b16 %v121
    %v591 = vunpack.c.l.b16 %v122
    %v592 = vunpack.c.h.b16 %v122
    %v593 = vunpack.c.l.b16 %v123
    %v594 = vunpack.c.h.b16 %v123
    %v595 = vunpack.c.l.b16 %v124
    %v596 = vunpack.c.h.b16 %v124
    %v597 = vunpack.c.l.b16 %v125
    %v598 = vunpack.c.h.b16 %v125
    %v599 = vunpack.c.l.b16 %v126
    %v600 = vunpack.c.h.b16 %v126
    %v601 = vunpack.c.l.b16 %v127
    %v602 = vunpack.c.h.b16 %v127
    %v603 = vunpack.c.l.b16 %v128
    %v604 = vunpack.c.h.b16 %v128
    %v605 = vunpack.c.l.b16 %v129
    %v606 = vunpack.c.h.b16 %v129
    %v607 = vunpack.c.l.b16 %v130
    %v608 = vunpack.c.h.b16 %v130
    %v609 = vunpack.c.l.b16 %v131
    %v610 = vunpack.c.h.b16 %v131
    %v611 = vunpack.c.l.b16 %v132
    %v612 = vunpack.c.h.b16 %v132
    %v613 = vunpack.c.l.b16 %v133
    %v614 = vunpack.c.h.b16 %v133
    %v615 = vunpack.c.l.b16 %v134
    %v616 = vunpack.c.h.b16 %v134
    %v617 = vunpack.c.l.b16 %v135
    %v618 = vunpack.c.h.b16 %v135
    %v619 = vunpack.c.l.b16 %v136
    %v620 = vunpack.c.h.b16 %v136
    %v621 = vunpack.c.l.b16 %v137
    %v622 = vunpack.c.h.b16 %v137
    %v623 = vunpack.c.l.b16 %v138
    %v624 = vunpack.c.h.b16 %v138
    %v625 = vunpack.c.l.b16 %v139
    %v626 = vunpack.c.h.b16 %v139
    %v627 = vunpack.c.l.b16 %v140
    %v628 = vunpack.c.h.b16 %v140
    %v629 = vunpack.c.l.b16 %v141
    %v630 = vunpack.c.h.b16 %v141
    %v631 = vunpack.c.l.b16 %v142
    %v632 = vunpack.c.h.b16 %v142
    %v633 = vunpack.c.l.b16 %v143
    %v634 = vunpack.c.h.b16 %v143
    %v635 = vunpack.c.l.b16 %v144
    %v636 = vunpack.c.h.b16 %v144
    %v637 = vunpack.c.l.b16 %v145
    %v638 = vunpack.c.h.b16 %v145
    %v639 = vunpack.c.l.b16 %v146
    %v640 = vunpack.c.h.b16 %v146
    %v641 = vunpack.c.l.b16 %v147
    %v642 = vunpack.c.h.b16 %v147
    %v643 = vunpack.c.l.b16 %v148
    %v644 = vunpack.c.h.b16 %v148
    %v645 = vunpack.c.l.b16 %v149
    %v646 = vunpack.c.h.b16 %v149
    %v647 = vunpack.c.l.b16 %v150
    %v648 = vunpack.c.h.b16 %v150
    %v649 = vunpack.c.l.b16 %v151
    %v650 = vunpack.c.h.b16 %v151
    %v651 = vunpack.c.l.b16 %v152
    %v652 = vunpack.c.h.b16 %v152
    %v653 = vunpack.c.l.b16 %v153
    %v654 = vunpack.c.h.b16 %v153
    %v655 = vunpack.c.l.b16 %v154
    %v656 = vunpack.c.h.b16 %v154
    %v657 = vunpack.c.l.b16 %v155
    %v658 = vunpack.c.h.b16 %v155
    %v659 = vunpack.c.l.b16 %v156
    %v660 = vunpack.c.h.b16 %v156
    %v661 = vunpack.c.l.b16 %v157
    %v662 = vunpack.c.h.b16 %v157
    %v663 = vunpack.c.l.b16 %v158
    %v664 = vunpack.c.h.b16 %v158
    %v665 = vunpack.c.l.b16 %v159
    %v666 = vunpack.c.h.b16 %v159
    %v667 = vunpack.c.l.b16 %v160
    %v668 = vunpack.c.h.b16 %v160
    %v669 = vunpack.c.l.b16 %v161
    %v670 = vunpack.c.h.b16 %v161
    %v671 = vunpack.c.l.b16 %v162
    %v672 = vunpack.c.h.b16 %v162
    %v673 = vunpack.c.l.b16 %v163
    %v674 = vunpack.c.h.b16 %v163
    %v675 = vunpack.c.l.b16 %v164
    %v676 = vunpack.c.h.b16 %v164
    %v677 = vunpack.c.l.b16 %v165
    %v678 = vunpack.c.h.b16 %v165
    %v679 = vunpack.c.l.b16 %v166
    %v680 = vunpack.c.h.b16 %v166
    %v681 = vunpack.c.l.b16 %v167
    %v682 = vunpack.c.h.b16 %v167
    %v683 = vunpack.c.l.b16 %v168
    %v684 = vunpack.c.h.b16 %v168
    %v685 = vunpack.c.l.b16 %v169
    %v686 = vunpack.c.h.b16 %v169
    %v687 = vunpack.c.l.b16 %v170
    %v688 = vunpack.c.h.b16 %v170
    %v689 = vunpack.c.l.b16 %v171
    %v690 = vunpack.c.h.b16 %v171
    %v691 = vunpack.c.l.b16 %v172
    %v692 = vunpack.c.h.b16 %v172
    %v693 = vunpack.c.l.b16 %v173
    %v694 = vunpack.c.h.b16 %v173
    %v695 = vunpack.c.l.b16 %v174
    %v696 = vunpack.c.h.b16 %v174
    %v697 = vunpack.c.l.b16 %v175
    %v698 = vunpack.c.h.b16 %v175
    %v699 = vunpack.c.l.b16 %v176
    %v700 = vunpack.c.h.b16 %v176
    %v701 = vunpack.c.l.b16 %v177
    %v702 = vunpack.c.h.b16 %v177
    %v703 = vunpack.c.l.b16 %v178
    %v704 = vunpack.c.h.b16 %v178
    %v705 = vunpack.c.l.b16 %v179
    %v706 = vunpack.c.h.b16 %v179
    %v707 = vunpack.c.l.b16 %v180
    %v708 = vunpack.c.h.b16 %v180
    %v709 = vunpack.c.l.b16 %v181
    %v710 = vunpack.c.h.b16 %v181
    %v711 = vunpack.c.l.b16 %v182
    %v712 = vunpack.c.h.b16 %v182
    %v713 = vunpack.c.l.b16 %v183
    %v714 = vunpack.c.h.b16 %v183
    %v715 = vunpack.c.l.b16 %v184
    %v716 = vunpack.c.h.b16 %v184
    %v717 = vunpack.c.l.b16 %v185
    %v718 = vunpack.c.h.b16 %v185
    %v719 = vunpack.c.l.b16 %v186
    %v720 = vunpack.c.h.b16 %v186
    %v721 = vunpack.c.l.b16 %v187
    %v722 = vunpack.c.h.b16 %v187
    %v723 = vunpack.c.l.b16 %v188
    %v724 = vunpack.c.h.b16 %v188
    %v725 = vunpack.c.l.b16 %v189
    %v726 = vunpack.c.h.b16 %v189
    %v727 = vunpack.c.l.b16 %v190
    %v728 = vunpack.c.h.b16 %v190
    %v729 = vunpack.c.l.b16 %v191
    %v730 = vunpack.c.h.b16 %v191
    %v731 = vunpack.c.l.b16 %v192
    %v732 = vunpack.c.h.b16 %v192
    %v733 = vunpack.c.l.b16 %v193
    %v734 = vunpack.c.h.b16 %v193
    %v735 = vunpack.c.l.b16 %v194
    %v736 = vunpack.c.h.b16 %v194
    %v737 = vunpack.c.l.b16 %v195
    %v738 = vunpack.c.h.b16 %v195
    %v739 = vunpack.c.l.b16 %v196
    %v740 = vunpack.c.h.b16 %v196
    %v741 = vunpack.c.l.b16 %v197
    %v742 = vunpack.c.h.b16 %v197
    %v743 = vunpack.c.l.b16 %v198
    %v744 = vunpack.c.h.b16 %v198
    %v745 = vunpack.c.l.b16 %v199
    %v746 = vunpack.c.h.b16 %v199
    %v747 = vunpack.c.l.b16 %v200
    %v748 = vunpack.c.h.b16 %v200
    %v749 = vunpack.c.l.b16 %v201
    %v750 = vunpack.c.h.b16 %v201
    %v751 = vunpack.c.l.b16 %v202
    %v752 = vunpack.c.h.b16 %v202
    %v753 = vunpack.c.l.b16 %v203
    %v754 = vunpack.c.h.b16 %v203
    %v755 = vunpack.c.l.b16 %v204
    %v756 = vunpack.c.h.b16 %v204
    %v757 = vunpack.c.l.b16 %v205
    %v758 = vunpack.c.h.b16 %v205
    %v759 = vunpack.c.l.b16 %v206
    %v760 = vunpack.c.h.b16 %v206
    %v761 = vunpack.c.l.b16 %v207
    %v762 = vunpack.c.h.b16 %v207
    %v763 = vunpack.c.l.b16 %v208
    %v764 = vunpack.c.h.b16 %v208
    %v765 = vunpack.c.l.b16 %v209
    %v766 = vunpack.c.h.b16 %v209
    %v767 = vunpack.c.l.b16 %v210
    %v768 = vunpack.c.h.b16 %v210
    %v769 = vunpack.c.l.b16 %v211
    %v770 = vunpack.c.h.b16 %v211
    %v771 = vunpack.c.l.b16 %v212
    %v772 = vunpack.c.h.b16 %v212
    %v773 = vunpack.c.l.b16 %v213
    %v774 = vunpack.c.h.b16 %v213
    %v775 = vunpack.c.l.b16 %v214
    %v776 = vunpack.c.h.b16 %v214
    %v777 = vunpack.c.l.b16 %v215
    %v778 = vunpack.c.h.b16 %v215
    %v779 = vunpack.c.l.b16 %v216
    %v780 = vunpack.c.h.b16 %v216
    %v781 = vunpack.c.l.b16 %v217
    %v782 = vunpack.c.h.b16 %v217
    %v783 = vunpack.c.l.b16 %v218
    %v784 = vunpack.c.h.b16 %v218
    %v785 = vunpack.c.l.b16 %v219
    %v786 = vunpack.c.h.b16 %v219
    %v787 = vunpack.c.l.b16 %v220
    %v788 = vunpack.c.h.b16 %v220
    %v789 = vunpack.c.l.b16 %v221
    %v790 = vunpack.c.h.b16 %v221
    %v791 = vunpack.c.l.b16 %v222
    %v792 = vunpack.c.h.b16 %v222
    %v793 = vunpack.c.l.b16 %v223
    %v794 = vunpack.c.h.b16 %v223
    %v795 = vunpack.c.l.b16 %v224
    %v796 = vunpack.c.h.b16 %v224
    %v797 = vunpack.c.l.b16 %v225
    %v798 = vunpack.c.h.b16 %v225
    %v799 = vunpack.c.l.b16 %v226
    %v800 = vunpack.c.h.b16 %v226
    %v801 = vunpack.c.l.b16 %v227
    %v802 = vunpack.c.h.b16 %v227
    %v803 = vunpack.c.l.b16 %v228
    %v804 = vunpack.c.h.b16 %v228
    %v805 = vunpack.c.l.b16 %v229
    %v806 = vunpack.c.h.b16 %v229
    %v807 = vunpack.c.l.b16 %v230
    %v808 = vunpack.c.h.b16 %v230
    %v809 = vunpack.c.l.b16 %v231
    %v810 = vunpack.c.h.b16 %v231
    %v811 = vunpack.c.l.b16 %v232
    %v812 = vunpack.c.h.b16 %v232
    %v813 = vunpack.c.l.b16 %v233
    %v814 = vunpack.c.h.b16 %v233
    %v815 = vunpack.c.l.b16 %v234
    %v816 = vunpack.c.h.b16 %v234
    %v817 = vunpack.c.l.b16 %v235
    %v818 = vunpack.c.h.b16 %v235
    %v819 = vunpack.c.l.b16 %v236
    %v820 = vunpack.c.h.b16 %v236
    %v821 = vunpack.c.l.b16 %v237
    %v822 = vunpack.c.h.b16 %v237
    %v823 = vunpack.c.l.b16 %v238
    %v824 = vunpack.c.h.b16 %v238
    %v825 = vunpack.c.l.b16 %v239
    %v826 = vunpack.c.h.b16 %v239
    %v827 = vunpack.c.l.b16 %v240
    %v828 = vunpack.c.h.b16 %v240
    %v829 = vunpack.c.l.b16 %v241
    %v830 = vunpack.c.h.b16 %v241
    %v831 = vunpack.c.l.b16 %v242
    %v832 = vunpack.c.h.b16 %v242
    %v833 = vunpack.c.l.b16 %v243
    %v834 = vunpack.c.h.b16 %v243
    %v835 = vunpack.c.l.b16 %v244
    %v836 = vunpack.c.h.b16 %v244
    %v837 = vunpack.c.l.b16 %v245
    %v838 = vunpack.c.h.b16 %v245
    %v839 = vunpack.c.l.b16 %v246
    %v840 = vunpack.c.h.b16 %v246
    %v841 = vunpack.c.l.b16 %v247
    %v842 = vunpack.c.h.b16 %v247
    %v843 = vunpack.c.l.b16 %v248
    %v844 = vunpack.c.h.b16 %v248
    %v845 = vunpack.c.l.b16 %v249
    %v846 = vunpack.c.h.b16 %v249
    %v847 = vunpack.c.l.b16 %v250
    %v848 = vunpack.c.h.b16 %v250
    %v849 = vpack.c.b16 %v461, %v457
    %v850 = vpack.c.b16 %v462, %v458
    %v851 = vpack.c.b16 %v463, %v459
    %v852 = vpack.c.b16 %v464, %v460
    %v853 = vpack.c.b16 %v469, %v465
    %v854 = vpack.c.b16 %v470, %v466
    %v855 = vpack.c.b16 %v471, %v467
    %v856 = vpack.c.b16 %v472, %v468
    %v857 = vpack.c.b16 %v477, %v473
    %v858 = vpack.c.b16 %v478, %v474
    %v859 = vpack.c.b16 %v479, %v475
    %v860 = vpack.c.b16 %v480, %v476
    %v861 = vpack.c.b16 %v485, %v481
    %v862 = vpack.c.b16 %v486, %v482
    %v863 = vpack.c.b16 %v487, %v483
    %v864 = vpack.c.b16 %v488, %v484
    %v865 = vpack.c.b16 %v493, %v489
    %v866 = vpack.c.b16 %v494, %v490
    %v867 = vpack.c.b16 %v495, %v491
    %v868 = vpack.c.b16 %v496, %v492
    %v869 = vpack.c.b16 %v501, %v497
    %v870 = vpack.c.b16 %v502, %v498
    %v871 = vpack.c.b16 %v503, %v499
    %v872 = vpack.c.b16 %v504, %v500
    %v873 = vpack.c.b16 %v509, %v505
    %v874 = vpack.c.b16 %v510, %v506
    %v875 = vpack.c.b16 %v511, %v507
    %v876 = vpack.c.b16 %v512, %v508
    %v877 = vpack.c.b16 %v517, %v513
    %v878 = vpack.c.b16 %v518, %v514
    %v879 = vpack.c.b16 %v519, %v515
    %v880 = vpack.c.b16 %v520, %v516
    %v881 = vpack.c.b16 %v525, %v521
    %v882 = vpack.c.b16 %v526, %v522
    %v883 = vpack.c.b16 %v527, %v523
    %v884 = vpack.c.b16 %v528, %v524
    %v885 = vpack.c.b16 %v533, %v529
    %v886 = vpack.c.b16 %v534, %v530
    %v887 = vpack.c.b16 %v535, %v531
    %v888 = vpack.c.b16 %v536, %v532
    %v889 = vpack.c.b16 %v541, %v537
    %v890 = vpack.c.b16 %v542, %v538
    %v891 = vpack.c.b16 %v543, %v539
    %v892 = vpack.c.b16 %v544, %v540
    %v893 = vpack.c.b16 %v549, %v545
    %v894 = vpack.c.b16 %v550, %v546
    %v895 = vpack.c.b16 %v551, %v547
    %v896 = vpack.c.b16 %v552, %v548
    %v897 = vpack.c.b16 %v557, %v553
    %v898 = vpack.c.b16 %v558, %v554
    %v899 = vpack.c.b16 %v559, %v555
    %v900 = vpack.c.b16 %v560, %v556
    %v901 = vpack.c.b16 %v565, %v561
    %v902 = vpack.c.b16 %v566, %v562
    %v903 = vpack.c.b16 %v567, %v563
    %v904 = vpack.c.b16 %v568, %v564
    %v905 = vpack.c.b16 %v573, %v569
    %v906 = vpack.c.b16 %v574, %v570
    %v907 = vpack.c.b16 %v575, %v571
    %v908 = vpack.c.b16 %v576, %v572
    %v909 = vpack.c.b16 %v581, %v577
    %v910 = vpack.c.b16 %v582, %v578
    %v911 = vpack.c.b16 %v583, %v579
    %v912 = vpack.c.b16 %v584, %v580
    %v913 = vpack.c.b16 %v589, %v585
    %v914 = vpack.c.b16 %v590, %v586
    %v915 = vpack.c.b16 %v591, %v587
    %v916 = vpack.c.b16 %v592, %v588
    %v917 = vpack.c.b16 %v597, %v593
    %v918 = vpack.c.b16 %v598, %v594
    %v919 = vpack.c.b16 %v599, %v595
    %v920 = vpack.c.b16 %v600, %v596
    %v921 = vpack.c.b16 %v605, %v601
    %v922 = vpack.c.b16 %v606, %v602
    %v923 = vpack.c.b16 %v607, %v603
    %v924 = vpack.c.b16 %v608, %v604
    %v925 = vpack.c.b16 %v613, %v609
    %v926 = vpack.c.b16 %v614, %v610
    %v927 = vpack.c.b16 %v615, %v611
    %v928 = vpack.c.b16 %v616, %v612
    %v929 = vpack.c.b16 %v621, %v617
    %v930 = vpack.c.b16 %v622, %v618
    %v931 = vpack.c.b16 %v623, %v619
    %v932 = vpack.c.b16 %v624, %v620
    %v933 = vpack.c.b16 %v629, %v625
    %v934 = vpack.c.b16 %v630, %v626
    %v935 = vpack.c.b16 %v631, %v627
    %v936 = vpack.c.b16 %v632, %v628
    %v937 = vpack.c.b16 %v637, %v633
    %v938 = vpack.c.b16 %v638, %v634
    %v939 = vpack.c.b16 %v639, %v635
    %v940 = vpack.c.b16 %v640, %v636
    %v941 = vpack.c.b16 %v645, %v641
    %v942 = vpack.c.b16 %v646, %v642
    %v943 = vpack.c.b16 %v647, %v643
    %v944 = vpack.c.b16 %v648, %v644
    %v945 = vpack.c.b16 %v653, %v649
    %v946 = vpack.c.b16 %v654, %v650
    %v947 = vpack.c.b16 %v655, %v651
    %v948 = vpack.c.b16 %v656, %v652
    %v949 = vpack.c.b16 %v661, %v657
    %v950 = vpack.c.b16 %v662, %v658
    %v951 = vpack.c.b16 %v663, %v659
    %v952 = vpack.c.b16 %v664, %v660
    %v953 = vpack.c.b16 %v669, %v665
    %v954 = vpack.c.b16 %v670, %v666
    %v955 = vpack.c.b16 %v671, %v667
    %v956 = vpack.c.b16 %v672, %v668
    %v957 = vpack.c.b16 %v677, %v673
    %v958 = vpack.c.b16 %v678, %v674
    %v959 = vpack.c.b16 %v679, %v675
    %v960 = vpack.c.b16 %v680, %v676
    %v961 = vpack.c.b16 %v685, %v681
    %v962 = vpack.c.b16 %v686, %v682
    %v963 = vpack.c.b16 %v687, %v683
    %v964 = vpack.c.b16 %v688, %v684
    %v965 = vpack.c.b16 %v693, %v689
    %v966 = vpack.c.b16 %v694, %v690
    %v967 = vpack.c.b16 %v695, %v691
    %v968 = vpack.c.b16 %v696, %v692
    %v969 = vpack.c.b16 %v701, %v697
    %v970 = vpack.c.b16 %v702, %v698
    %v971 = vpack.c.b16 %v703, %v699
    %v972 = vpack.c.b16 %v704, %v700
    %v973 = vpack.c.b16 %v709, %v705
    %v974 = vpack.c.b16 %v710, %v706
    %v975 = vpack.c.b16 %v711, %v707
    %v976 = vpack.c.b16 %v712, %v708
    %v977 = vpack.c.b16 %v717, %v713
    %v978 = vpack.c.b16 %v718, %v714
    %v979 = vpack.c.b16 %v719, %v715
    %v980 = vpack.c.b16 %v720, %v716
    %v981 = vpack.c.b16 %v725, %v721
    %v982 = vpack.c.b16 %v726, %v722
    %v983 = vpack.c.b16 %v727, %v723
    %v984 = vpack.c.b16 %v728, %v724
    %v985 = vpack.c.b16 %v733, %v729
    %v986 = vpack.c.b16 %v734, %v730
    %v987 = vpack.c.b16 %v735, %v731
    %v988 = vpack.c.b16 %v736, %v732
    %v989 = vpack.c.b16 %v741, %v737
    %v990 = vpack.c.b16 %v742, %v738
    %v991 = vpack.c.b16 %v743, %v739
    %v992 = vpack.c.b16 %v744, %v740
    %v993 = vpack.c.b16 %v749, %v745
    %v994 = vpack.c.b16 %v750, %v746
    %v995 = vpack.c.b16 %v751, %v747
    %v996 = vpack.c.b16 %v752, %v748
    %v997 = vpack.c.b16 %v757, %v753
    %v998 = vpack.c.b16 %v758, %v754
    %v999 = vpack.c.b16 %v759, %v755
    %v1000 = vpack.c.b16 %v760, %v756
    %v1001 = vpack.c.b16 %v765, %v761
    %v1002 = vpack.c.b16 %v766, %v762
    %v1003 = vpack.c.b16 %v767, %v763
    %v1004 = vpack.c.b16 %v768, %v764
    %v1005 = vpack.c.b16 %v773, %v769
    %v1006 = vpack.c.b16 %v774, %v770
    %v1007 = vpack.c.b16 %v775, %v771
    %v1008 = vpack.c.b16 %v776, %v772
    %v1009 = vpack.c.b16 %v781, %v777
    %v1010 = vpack.c.b16 %v782, %v778
    %v1011 = vpack.c.b16 %v783, %v779
    %v1012 = vpack.c.b16 %v784, %v780
    %v1013 = vpack.c.b16 %v789, %v785
    %v1014 = vpack.c.b16 %v790, %v786
    %v1015 = vpack.c.b16 %v791, %v787
    %v1016 = vpack.c.b16 %v792, %v788
    %v1017 = vpack.c.b16 %v797, %v793
    %v1018 = vpack.c.b16 %v798, %v794
    %v1019 = vpack.c.b16 %v799, %v795
    %v1020 = vpack.c.b16 %v800, %v796
    %v1021 = vpack.c.b16 %v805, %v801
    %v1022 = vpack.c.b16 %v806, %v802
    %v1023 = vpack.c.b16 %v807, %v803
    %v1024 = vpack.c.b16 %v808, %v804
    %v1025 = vpack.c.b16 %v813, %v809
    %v1026 = vpack.c.b16 %v814, %v810
    %v1027 = vpack.c.b16 %v815, %v811
    %v1028 = vpack.c.b16 %v816, %v812
    %v1029 = vpack.c.b16 %v821, %v817
    %v1030 = vpack.c.b16 %v822, %v818
    %v1031 = vpack.c.b16 %v823, %v819
    %v1032 = vpack.c.b16 %v824, %v820
    %v1033 = vpack.c.b16 %v829, %v825
    %v1034 = vpack.c.b16 %v830, %v826
    %v1035 = vpack.c.b16 %v831, %v827
    %v1036 = vpack.c.b16 %v832, %v828
    %v1037 = vpack.c.b16 %v837, %v833
    %v1038 = vpack.c.b16 %v838, %v834
    %v1039 = vpack.c.b16 %v839, %v835
    %v1040 = vpack.c.b16 %v840, %v836
    %v1041 = vpack.c.b16 %v845, %v841
    %v1042 = vpack.c.b16 %v846, %v842
    %v1043 = vpack.c.b16 %v847, %v843
    %v1044 = vpack.c.b16 %v848, %v844
    %vm1241 = vcmask 130048
    %v1243 = vsel %vm1241, %v53, 0
    %1245 = vmatpush.bf16.msra.mxu0 %v877
    %1246 = vmatpush.bf16.msra.mxu0 %v873
    %1247 = vmatpush.bf16.msra.mxu0 %v869
    %1248 = vmatpush.bf16.msra.mxu0 %v865
    %1249 = vmatpush.bf16.msra.mxu0 %v861
    %1250 = vmatpush.bf16.msra.mxu0 %v857
    %1251 = vmatpush.bf16.msra.mxu0 %v853
    %1252 = vmatpush.bf16.msra.mxu0 %v849
    %1253 = vmatmul.bf16.gmra.mxu0 %v47
    %v1254 = vpop.f32.mrf.mxu0
    %v1255 = vadd.f32 %v253, %v1254
    %v1256 = vpop.f32.mrf.mxu0
    %1257 = vdwg.mxu0
    %1258 = vmatpush.bf16.msra.mxu0 %v909
    %1259 = vmatpush.bf16.msra.mxu0 %v905
    %1260 = vmatpush.bf16.msra.mxu0 %v901
    %1261 = vmatpush.bf16.msra.mxu0 %v897
    %1262 = vmatpush.bf16.msra.mxu0 %v893
    %1263 = vmatpush.bf16.msra.mxu0 %v889
    %1264 = vmatpush.bf16.msra.mxu0 %v885
    %1265 = vmatpush.bf16.msra.mxu0 %v881
    %1266 = vmatmul.bf16.gmra.mxu0 %v48
    %v1267 = vpop.f32.mrf.mxu0
    %v1268 = vadd.f32 %v1255, %v1267
    %v1269 = vpop.f32.mrf.mxu0
    %1270 = vdwg.mxu0
    %1271 = vmatpush.bf16.msra.mxu0 %v941
    %1272 = vmatpush.bf16.msra.mxu0 %v937
    %1273 = vmatpush.bf16.msra.mxu0 %v933
    %1274 = vmatpush.bf16.msra.mxu0 %v929
    %1275 = vmatpush.bf16.msra.mxu0 %v925
    %1276 = vmatpush.bf16.msra.mxu0 %v921
    %1277 = vmatpush.bf16.msra.mxu0 %v917
    %1278 = vmatpush.bf16.msra.mxu0 %v913
    %1279 = vmatmul.bf16.gmra.mxu0 %v49
    %v1280 = vpop.f32.mrf.mxu0
    %v1281 = vadd.f32 %v1268, %v1280
    %v1282 = vpop.f32.mrf.mxu0
    %1283 = vdwg.mxu0
    %1284 = vmatpush.bf16.msra.mxu0 %v973
    %1285 = vmatpush.bf16.msra.mxu0 %v969
    %1286 = vmatpush.bf16.msra.mxu0 %v965
    %1287 = vmatpush.bf16.msra.mxu0 %v961
    %1288 = vmatpush.bf16.msra.mxu0 %v957
    %1289 = vmatpush.bf16.msra.mxu0 %v953
    %1290 = vmatpush.bf16.msra.mxu0 %v949
    %1291 = vmatpush.bf16.msra.mxu0 %v945
    %1292 = vmatmul.bf16.gmra.mxu0 %v50
    %v1293 = vpop.f32.mrf.mxu0
    %v1294 = vadd.f32 %v1281, %v1293
    %v1295 = vpop.f32.mrf.mxu0
    %1296 = vdwg.mxu0
    %1297 = vmatpush.bf16.msra.mxu0 %v1005
    %1298 = vmatpush.bf16.msra.mxu0 %v1001
    %1299 = vmatpush.bf16.msra.mxu0 %v997
    %1300 = vmatpush.bf16.msra.mxu0 %v993
    %1301 = vmatpush.bf16.msra.mxu0 %v989
    %1302 = vmatpush.bf16.msra.mxu0 %v985
    %1303 = vmatpush.bf16.msra.mxu0 %v981
    %1304 = vmatpush.bf16.msra.mxu0 %v977
    %1305 = vmatmul.bf16.gmra.mxu0 %v51
    %v1306 = vpop.f32.mrf.mxu0
    %v1307 = vadd.f32 %v1294, %v1306
    %v1308 = vpop.f32.mrf.mxu0
    %1309 = vdwg.mxu0
    %1310 = vmatpush.bf16.msra.mxu0 %v1037
    %1311 = vmatpush.bf16.msra.mxu0 %v1033
    %1312 = vmatpush.bf16.msra.mxu0 %v1029
    %1313 = vmatpush.bf16.msra.mxu0 %v1025
    %1314 = vmatpush.bf16.msra.mxu0 %v1021
    %1315 = vmatpush.bf16.msra.mxu0 %v1017
    %1316 = vmatpush.bf16.msra.mxu0 %v1013
    %1317 = vmatpush.bf16.msra.mxu0 %v1009
    %1318 = vmatmul.bf16.gmra.mxu0 %v52
    %v1319 = vpop.f32.mrf.mxu0
    %v1320 = vadd.f32 %v1307, %v1319
    %v1321 = vpop.f32.mrf.mxu0
    %1322 = vdwg.mxu0
    %1323 = vmatpush.bf16.msra.mxu0 0
    %1324 = vmatpush.bf16.msra.mxu0 0
    %1325 = vmatpush.bf16.msra.mxu0 0
    %1326 = vmatpush.bf16.msra.mxu0 0
    %1327 = vmatpush.bf16.msra.mxu0 0
    %1328 = vmatpush.bf16.msra.mxu0 0
    %1329 = vmatpush.bf16.msra.mxu0 0
    %1330 = vmatpush.bf16.msra.mxu0 %v1041
    %1331 = vmatmul.bf16.gmra.mxu0 %v1243
    %v1332 = vpop.f32.mrf.mxu0
    %v1333 = vadd.f32 %v1320, %v1332
    %v1334 = vpop.f32.mrf.mxu0
    %1335 = vdwg.mxu0
    %1336 = vmatpush.bf16.msra.mxu0 %v878
    %1337 = vmatpush.bf16.msra.mxu0 %v874
    %1338 = vmatpush.bf16.msra.mxu0 %v870
    %1339 = vmatpush.bf16.msra.mxu0 %v866
    %1340 = vmatpush.bf16.msra.mxu0 %v862
    %1341 = vmatpush.bf16.msra.mxu0 %v858
    %1342 = vmatpush.bf16.msra.mxu0 %v854
    %1343 = vmatpush.bf16.msra.mxu0 %v850
    %1344 = vmatmul.bf16.gmra.mxu0 %v47
    %v1345 = vpop.f32.mrf.mxu0
    %v1346 = vadd.f32 %v254, %v1345
    %v1347 = vpop.f32.mrf.mxu0
    %1348 = vdwg.mxu0
    %1349 = vmatpush.bf16.msra.mxu0 %v910
    %1350 = vmatpush.bf16.msra.mxu0 %v906
    %1351 = vmatpush.bf16.msra.mxu0 %v902
    %1352 = vmatpush.bf16.msra.mxu0 %v898
    %1353 = vmatpush.bf16.msra.mxu0 %v894
    %1354 = vmatpush.bf16.msra.mxu0 %v890
    %1355 = vmatpush.bf16.msra.mxu0 %v886
    %1356 = vmatpush.bf16.msra.mxu0 %v882
    %1357 = vmatmul.bf16.gmra.mxu0 %v48
    %v1358 = vpop.f32.mrf.mxu0
    %v1359 = vadd.f32 %v1346, %v1358
    %v1360 = vpop.f32.mrf.mxu0
    %1361 = vdwg.mxu0
    %1362 = vmatpush.bf16.msra.mxu0 %v942
    %1363 = vmatpush.bf16.msra.mxu0 %v938
    %1364 = vmatpush.bf16.msra.mxu0 %v934
    %1365 = vmatpush.bf16.msra.mxu0 %v930
    %1366 = vmatpush.bf16.msra.mxu0 %v926
    %1367 = vmatpush.bf16.msra.mxu0 %v922
    %1368 = vmatpush.bf16.msra.mxu0 %v918
    %1369 = vmatpush.bf16.msra.mxu0 %v914
    %1370 = vmatmul.bf16.gmra.mxu0 %v49
    %v1371 = vpop.f32.mrf.mxu0
    %v1372 = vadd.f32 %v1359, %v1371
    %v1373 = vpop.f32.mrf.mxu0
    %1374 = vdwg.mxu0
    %1375 = vmatpush.bf16.msra.mxu0 %v974
    %1376 = vmatpush.bf16.msra.mxu0 %v970
    %1377 = vmatpush.bf16.msra.mxu0 %v966
    %1378 = vmatpush.bf16.msra.mxu0 %v962
    %1379 = vmatpush.bf16.msra.mxu0 %v958
    %1380 = vmatpush.bf16.msra.mxu0 %v954
    %1381 = vmatpush.bf16.msra.mxu0 %v950
    %1382 = vmatpush.bf16.msra.mxu0 %v946
    %1383 = vmatmul.bf16.gmra.mxu0 %v50
    %v1384 = vpop.f32.mrf.mxu0
    %v1385 = vadd.f32 %v1372, %v1384
    %v1386 = vpop.f32.mrf.mxu0
    %1387 = vdwg.mxu0
    %1388 = vmatpush.bf16.msra.mxu0 %v1006
    %1389 = vmatpush.bf16.msra.mxu0 %v1002
    %1390 = vmatpush.bf16.msra.mxu0 %v998
    %1391 = vmatpush.bf16.msra.mxu0 %v994
    %1392 = vmatpush.bf16.msra.mxu0 %v990
    %1393 = vmatpush.bf16.msra.mxu0 %v986
    %1394 = vmatpush.bf16.msra.mxu0 %v982
    %1395 = vmatpush.bf16.msra.mxu0 %v978
    %1396 = vmatmul.bf16.gmra.mxu0 %v51
    %v1397 = vpop.f32.mrf.mxu0
    %v1398 = vadd.f32 %v1385, %v1397
    %v1399 = vpop.f32.mrf.mxu0
    %1400 = vdwg.mxu0
    %1401 = vmatpush.bf16.msra.mxu0 %v1038
    %1402 = vmatpush.bf16.msra.mxu0 %v1034
    %1403 = vmatpush.bf16.msra.mxu0 %v1030
    %1404 = vmatpush.bf16.msra.mxu0 %v1026
    %1405 = vmatpush.bf16.msra.mxu0 %v1022
    %1406 = vmatpush.bf16.msra.mxu0 %v1018
    %1407 = vmatpush.bf16.msra.mxu0 %v1014
    %1408 = vmatpush.bf16.msra.mxu0 %v1010
    %1409 = vmatmul.bf16.gmra.mxu0 %v52
    %v1410 = vpop.f32.mrf.mxu0
    %v1411 = vadd.f32 %v1398, %v1410
    %v1412 = vpop.f32.mrf.mxu0
    %1413 = vdwg.mxu0
    %1414 = vmatpush.bf16.msra.mxu0 0
    %1415 = vmatpush.bf16.msra.mxu0 0
    %1416 = vmatpush.bf16.msra.mxu0 0
    %1417 = vmatpush.bf16.msra.mxu0 0
    %1418 = vmatpush.bf16.msra.mxu0 0
    %1419 = vmatpush.bf16.msra.mxu0 0
    %1420 = vmatpush.bf16.msra.mxu0 0
    %1421 = vmatpush.bf16.msra.mxu0 %v1042
    %1422 = vmatmul.bf16.gmra.mxu0 %v1243
    %v1423 = vpop.f32.mrf.mxu0
    %v1424 = vadd.f32 %v1411, %v1423
    %v1425 = vpop.f32.mrf.mxu0
    %1426 = vdwg.mxu0
    %1427 = vmatpush.bf16.msra.mxu0 %v879
    %1428 = vmatpush.bf16.msra.mxu0 %v875
    %1429 = vmatpush.bf16.msra.mxu0 %v871
    %1430 = vmatpush.bf16.msra.mxu0 %v867
    %1431 = vmatpush.bf16.msra.mxu0 %v863
    %1432 = vmatpush.bf16.msra.mxu0 %v859
    %1433 = vmatpush.bf16.msra.mxu0 %v855
    %1434 = vmatpush.bf16.msra.mxu0 %v851
    %1435 = vmatmul.bf16.gmra.mxu0 %v47
    %v1436 = vpop.f32.mrf.mxu0
    %v1437 = vadd.f32 %v255, %v1436
    %v1438 = vpop.f32.mrf.mxu0
    %1439 = vdwg.mxu0
    %1440 = vmatpush.bf16.msra.mxu0 %v911
    %1441 = vmatpush.bf16.msra.mxu0 %v907
    %1442 = vmatpush.bf16.msra.mxu0 %v903
    %1443 = vmatpush.bf16.msra.mxu0 %v899
    %1444 = vmatpush.bf16.msra.mxu0 %v895
    %1445 = vmatpush.bf16.msra.mxu0 %v891
    %1446 = vmatpush.bf16.msra.mxu0 %v887
    %1447 = vmatpush.bf16.msra.mxu0 %v883
    %1448 = vmatmul.bf16.gmra.mxu0 %v48
    %v1449 = vpop.f32.mrf.mxu0
    %v1450 = vadd.f32 %v1437, %v1449
    %v1451 = vpop.f32.mrf.mxu0
    %1452 = vdwg.mxu0
    %1453 = vmatpush.bf16.msra.mxu0 %v943
    %1454 = vmatpush.bf16.msra.mxu0 %v939
    %1455 = vmatpush.bf16.msra.mxu0 %v935
    %1456 = vmatpush.bf16.msra.mxu0 %v931
    %1457 = vmatpush.bf16.msra.mxu0 %v927
    %1458 = vmatpush.bf16.msra.mxu0 %v923
    %1459 = vmatpush.bf16.msra.mxu0 %v919
    %1460 = vmatpush.bf16.msra.mxu0 %v915
    %1461 = vmatmul.bf16.gmra.mxu0 %v49
    %v1462 = vpop.f32.mrf.mxu0
    %v1463 = vadd.f32 %v1450, %v1462
    %v1464 = vpop.f32.mrf.mxu0
    %1465 = vdwg.mxu0
    %1466 = vmatpush.bf16.msra.mxu0 %v975
    %1467 = vmatpush.bf16.msra.mxu0 %v971
    %1468 = vmatpush.bf16.msra.mxu0 %v967
    %1469 = vmatpush.bf16.msra.mxu0 %v963
    %1470 = vmatpush.bf16.msra.mxu0 %v959
    %1471 = vmatpush.bf16.msra.mxu0 %v955
    %1472 = vmatpush.bf16.msra.mxu0 %v951
    %1473 = vmatpush.bf16.msra.mxu0 %v947
    %1474 = vmatmul.bf16.gmra.mxu0 %v50
    %v1475 = vpop.f32.mrf.mxu0
    %v1476 = vadd.f32 %v1463, %v1475
    %v1477 = vpop.f32.mrf.mxu0
    %1478 = vdwg.mxu0
    %1479 = vmatpush.bf16.msra.mxu0 %v1007
    %1480 = vmatpush.bf16.msra.mxu0 %v1003
    %1481 = vmatpush.bf16.msra.mxu0 %v999
    %1482 = vmatpush.bf16.msra.mxu0 %v995
    %1483 = vmatpush.bf16.msra.mxu0 %v991
    %1484 = vmatpush.bf16.msra.mxu0 %v987
    %1485 = vmatpush.bf16.msra.mxu0 %v983
    %1486 = vmatpush.bf16.msra.mxu0 %v979
    %1487 = vmatmul.bf16.gmra.mxu0 %v51
    %v1488 = vpop.f32.mrf.mxu0
    %v1489 = vadd.f32 %v1476, %v1488
    %v1490 = vpop.f32.mrf.mxu0
    %1491 = vdwg.mxu0
    %1492 = vmatpush.bf16.msra.mxu0 %v1039
    %1493 = vmatpush.bf16.msra.mxu0 %v1035
    %1494 = vmatpush.bf16.msra.mxu0 %v1031
    %1495 = vmatpush.bf16.msra.mxu0 %v1027
    %1496 = vmatpush.bf16.msra.mxu0 %v1023
    %1497 = vmatpush.bf16.msra.mxu0 %v1019
    %1498 = vmatpush.bf16.msra.mxu0 %v1015
    %1499 = vmatpush.bf16.msra.mxu0 %v1011
    %1500 = vmatmul.bf16.gmra.mxu0 %v52
    %v1501 = vpop.f32.mrf.mxu0
    %v1502 = vadd.f32 %v1489, %v1501
    %v1503 = vpop.f32.mrf.mxu0
    %1504 = vdwg.mxu0
    %1505 = vmatpush.bf16.msra.mxu0 0
    %1506 = vmatpush.bf16.msra.mxu0 0
    %1507 = vmatpush.bf16.msra.mxu0 0
    %1508 = vmatpush.bf16.msra.mxu0 0
    %1509 = vmatpush.bf16.msra.mxu0 0
    %1510 = vmatpush.bf16.msra.mxu0 0
    %1511 = vmatpush.bf16.msra.mxu0 0
    %1512 = vmatpush.bf16.msra.mxu0 %v1043
    %1513 = vmatmul.bf16.gmra.mxu0 %v1243
    %v1514 = vpop.f32.mrf.mxu0
    %v1515 = vadd.f32 %v1502, %v1514
    %v1516 = vpop.f32.mrf.mxu0
    %1517 = vdwg.mxu0
    %1518 = vmatpush.bf16.msra.mxu0 %v880
    %1519 = vmatpush.bf16.msra.mxu0 %v876
    %1520 = vmatpush.bf16.msra.mxu0 %v872
    %1521 = vmatpush.bf16.msra.mxu0 %v868
    %1522 = vmatpush.bf16.msra.mxu0 %v864
    %1523 = vmatpush.bf16.msra.mxu0 %v860
    %1524 = vmatpush.bf16.msra.mxu0 %v856
    %1525 = vmatpush.bf16.msra.mxu0 %v852
    %1526 = vmatmul.bf16.gmra.mxu0 %v47
    %v1527 = vpop.f32.mrf.mxu0
    %v1528 = vadd.f32 %v256, %v1527
    %v1529 = vpop.f32.mrf.mxu0
    %1530 = vdwg.mxu0
    %1531 = vmatpush.bf16.msra.mxu0 %v912
    %1532 = vmatpush.bf16.msra.mxu0 %v908
    %1533 = vmatpush.bf16.msra.mxu0 %v904
    %1534 = vmatpush.bf16.msra.mxu0 %v900
    %1535 = vmatpush.bf16.msra.mxu0 %v896
    %1536 = vmatpush.bf16.msra.mxu0 %v892
    %1537 = vmatpush.bf16.msra.mxu0 %v888
    %1538 = vmatpush.bf16.msra.mxu0 %v884
    %1539 = vmatmul.bf16.gmra.mxu0 %v48
    %v1540 = vpop.f32.mrf.mxu0
    %v1541 = vadd.f32 %v1528, %v1540
    %v1542 = vpop.f32.mrf.mxu0
    %1543 = vdwg.mxu0
    %1544 = vmatpush.bf16.msra.mxu0 %v944
    %1545 = vmatpush.bf16.msra.mxu0 %v940
    %1546 = vmatpush.bf16.msra.mxu0 %v936
    %1547 = vmatpush.bf16.msra.mxu0 %v932
    %1548 = vmatpush.bf16.msra.mxu0 %v928
    %1549 = vmatpush.bf16.msra.mxu0 %v924
    %1550 = vmatpush.bf16.msra.mxu0 %v920
    %1551 = vmatpush.bf16.msra.mxu0 %v916
    %1552 = vmatmul.bf16.gmra.mxu0 %v49
    %v1553 = vpop.f32.mrf.mxu0
    %v1554 = vadd.f32 %v1541, %v1553
    %v1555 = vpop.f32.mrf.mxu0
    %1556 = vdwg.mxu0
    %1557 = vmatpush.bf16.msra.mxu0 %v976
    %1558 = vmatpush.bf16.msra.mxu0 %v972
    %1559 = vmatpush.bf16.msra.mxu0 %v968
    %1560 = vmatpush.bf16.msra.mxu0 %v964
    %1561 = vmatpush.bf16.msra.mxu0 %v960
    %1562 = vmatpush.bf16.msra.mxu0 %v956
    %1563 = vmatpush.bf16.msra.mxu0 %v952
    %1564 = vmatpush.bf16.msra.mxu0 %v948
    %1565 = vmatmul.bf16.gmra.mxu0 %v50
    %v1566 = vpop.f32.mrf.mxu0
    %v1567 = vadd.f32 %v1554, %v1566
    %v1568 = vpop.f32.mrf.mxu0
    %1569 = vdwg.mxu0
    %1570 = vmatpush.bf16.msra.mxu0 %v1008
    %1571 = vmatpush.bf16.msra.mxu0 %v1004
    %1572 = vmatpush.bf16.msra.mxu0 %v1000
    %1573 = vmatpush.bf16.msra.mxu0 %v996
    %1574 = vmatpush.bf16.msra.mxu0 %v992
    %1575 = vmatpush.bf16.msra.mxu0 %v988
    %1576 = vmatpush.bf16.msra.mxu0 %v984
    %1577 = vmatpush.bf16.msra.mxu0 %v980
    %1578 = vmatmul.bf16.gmra.mxu0 %v51
    %v1579 = vpop.f32.mrf.mxu0
    %v1580 = vadd.f32 %v1567, %v1579
    %v1581 = vpop.f32.mrf.mxu0
    %1582 = vdwg.mxu0
    %1583 = vmatpush.bf16.msra.mxu0 %v1040
    %1584 = vmatpush.bf16.msra.mxu0 %v1036
    %1585 = vmatpush.bf16.msra.mxu0 %v1032
    %1586 = vmatpush.bf16.msra.mxu0 %v1028
    %1587 = vmatpush.bf16.msra.mxu0 %v1024
    %1588 = vmatpush.bf16.msra.mxu0 %v1020
    %1589 = vmatpush.bf16.msra.mxu0 %v1016
    %1590 = vmatpush.bf16.msra.mxu0 %v1012
    %1591 = vmatmul.bf16.gmra.mxu0 %v52
    %v1592 = vpop.f32.mrf.mxu0
    %v1593 = vadd.f32 %v1580, %v1592
    %v1594 = vpop.f32.mrf.mxu0
    %1595 = vdwg.mxu0
    %1596 = vmatpush.bf16.msra.mxu0 0
    %1597 = vmatpush.bf16.msra.mxu0 0
    %1598 = vmatpush.bf16.msra.mxu0 0
    %1599 = vmatpush.bf16.msra.mxu0 0
    %1600 = vmatpush.bf16.msra.mxu0 0
    %1601 = vmatpush.bf16.msra.mxu0 0
    %1602 = vmatpush.bf16.msra.mxu0 0
    %1603 = vmatpush.bf16.msra.mxu0 %v1044
    %1604 = vmatmul.bf16.gmra.mxu0 %v1243
    %v1605 = vpop.f32.mrf.mxu0
    %v1606 = vadd.f32 %v1593, %v1605
    %v1607 = vpop.f32.mrf.mxu0
    %1608 = vdwg.mxu0
    %v1609 = vmax.f32 %v1333, 0.0
    %v1610 = vmax.f32 %v1424, 0.0
    %v1611 = vmax.f32 %v1515, 0.0
    %v1612 = vmax.f32 %v1606, 0.0
    %v1613 = vld [vmem:[%s4] sm:$0xff]
    %v1614 = vld [vmem:[%s4 + $0x8] sm:$0xff]
    %v1615 = vld [vmem:[%s4 + $0x10] sm:$0xff]
    %v1616 = vld [vmem:[%s4 + $0x18] sm:$0xff]
    %v1617 = vld [vmem:[%s4 + $0x20] sm:$0xff]
    %v1618 = vld [vmem:[%s4 + $0x28] sm:$0xff]
    %v1619 = vld [vmem:[%s4 + $0x30] sm:$0xff]
    %v1620 = vld [vmem:[%s4 + $0x38] sm:$0xff]
    %v1621 = vld [vmem:[%s4 + $0x40] sm:$0xff]
    %v1622 = vld [vmem:[%s4 + $0x48] sm:$0xff]
    %v1623 = vld [vmem:[%s4 + $0x50] sm:$0xff]
    %v1624 = vld [vmem:[%s4 + $0x58] sm:$0xff]
    %v1625 = vld [vmem:[%s4 + $0x60] sm:$0xff]
    %v1626 = vld [vmem:[%s4 + $0x68] sm:$0xff]
    %v1627 = vld [vmem:[%s4 + $0x70] sm:$0xff]
    %v1628 = vld [vmem:[%s4 + $0x78] sm:$0xff]
    %v1629 = vld [vmem:[%s4 + $0x80] sm:$0xff]
    %v1630 = vld [vmem:[%s4 + $0x88] sm:$0xff]
    %v1631 = vld [vmem:[%s4 + $0x90] sm:$0xff]
    %v1632 = vld [vmem:[%s4 + $0x98] sm:$0xff]
    %v1633 = vld [vmem:[%s4 + $0xa0] sm:$0xff]
    %v1634 = vld [vmem:[%s4 + $0xa8] sm:$0xff]
    %v1635 = vld [vmem:[%s4 + $0xb0] sm:$0xff]
    %v1636 = vld [vmem:[%s4 + $0xb8] sm:$0xff]
    %v1637 = vld [vmem:[%s4 + $0xc0] sm:$0xff]
    %v1638 = vld [vmem:[%s4 + $0xc8] sm:$0xff]
    %v1639 = vld [vmem:[%s4 + $0xd0] sm:$0xff]
    %v1640 = vld [vmem:[%s4 + $0xd8] sm:$0xff]
    %v1641 = vld [vmem:[%s4 + $0xe0] sm:$0xff]
    %v1642 = vld [vmem:[%s4 + $0xe8] sm:$0xff]
    %v1643 = vld [vmem:[%s4 + $0xf0] sm:$0xff]
    %v1644 = vld [vmem:[%s4 + $0xf8] sm:$0xff]
    %v1645 = vld [vmem:[%s4 + $0x100] sm:$0xff]
    %v1646 = vld [vmem:[%s4 + $0x108] sm:$0xff]
    %v1647 = vld [vmem:[%s4 + $0x110] sm:$0xff]
    %v1648 = vld [vmem:[%s4 + $0x118] sm:$0xff]
    %v1649 = vld [vmem:[%s4 + $0x120] sm:$0xff]
    %v1650 = vld [vmem:[%s4 + $0x128] sm:$0xff]
    %v1651 = vld [vmem:[%s4 + $0x130] sm:$0xff]
    %v1652 = vld [vmem:[%s4 + $0x138] sm:$0xff]
    %v1653 = vld [vmem:[%s4 + $0x140] sm:$0xff]
    %v1654 = vld [vmem:[%s4 + $0x148] sm:$0xff]
    %v1655 = vld [vmem:[%s4 + $0x150] sm:$0xff]
    %v1656 = vld [vmem:[%s4 + $0x158] sm:$0xff]
    %v1657 = vld [vmem:[%s4 + $0x160] sm:$0xff]
    %v1658 = vld [vmem:[%s4 + $0x168] sm:$0xff]
    %v1659 = vld [vmem:[%s4 + $0x170] sm:$0xff]
    %v1660 = vld [vmem:[%s4 + $0x178] sm:$0xff]
    %v1661 = vld [vmem:[%s4 + $0x180] sm:$0xff]
    %v1662 = vld [vmem:[%s4 + $0x188] sm:$0xff]
    %v1663 = vld [vmem:[%s5] sm:$0x1]
    %v1665 = vperm.slane %v1663, 0
    %v1668 = vsel %vm1241, %v1612, 0
    %1670 = vmatpush.msra.mxu0 %v1628
    %1671 = vmatpush.msra.mxu0 %v1627
    %1672 = vmatpush.msra.mxu0 %v1626
    %1673 = vmatpush.msra.mxu0 %v1625
    %1674 = vmatpush.msra.mxu0 %v1624
    %1675 = vmatpush.msra.mxu0 %v1623
    %1676 = vmatpush.msra.mxu0 %v1622
    %1677 = vmatpush.msra.mxu0 %v1621
    %1678 = vmatpush.msra.mxu0 %v1620
    %1679 = vmatpush.msra.mxu0 %v1619
    %1680 = vmatpush.msra.mxu0 %v1618
    %1681 = vmatpush.msra.mxu0 %v1617
    %1682 = vmatpush.msra.mxu0 %v1616
    %1683 = vmatpush.msra.mxu0 %v1615
    %1684 = vmatpush.msra.mxu0 %v1614
    %1685 = vmatpush.msra.mxu0 %v1613
    %1686 = vmatmul.f32.gmra.mxu0 %v1609
    %v1687 = vpop.f32.mrf.mxu0
    %v1688 = vadd.f32 %v1665, %v1687
    %1689 = vdwg.mxu0
    %1690 = vmatpush.msra.mxu0 %v1644
    %1691 = vmatpush.msra.mxu0 %v1643
    %1692 = vmatpush.msra.mxu0 %v1642
    %1693 = vmatpush.msra.mxu0 %v1641
    %1694 = vmatpush.msra.mxu0 %v1640
    %1695 = vmatpush.msra.mxu0 %v1639
    %1696 = vmatpush.msra.mxu0 %v1638
    %1697 = vmatpush.msra.mxu0 %v1637
    %1698 = vmatpush.msra.mxu0 %v1636
    %1699 = vmatpush.msra.mxu0 %v1635
    %1700 = vmatpush.msra.mxu0 %v1634
    %1701 = vmatpush.msra.mxu0 %v1633
    %1702 = vmatpush.msra.mxu0 %v1632
    %1703 = vmatpush.msra.mxu0 %v1631
    %1704 = vmatpush.msra.mxu0 %v1630
    %1705 = vmatpush.msra.mxu0 %v1629
    %1706 = vmatmul.f32.gmra.mxu0 %v1610
    %v1707 = vpop.f32.mrf.mxu0
    %v1708 = vadd.f32 %v1688, %v1707
    %1709 = vdwg.mxu0
    %1710 = vmatpush.msra.mxu0 %v1660
    %1711 = vmatpush.msra.mxu0 %v1659
    %1712 = vmatpush.msra.mxu0 %v1658
    %1713 = vmatpush.msra.mxu0 %v1657
    %1714 = vmatpush.msra.mxu0 %v1656
    %1715 = vmatpush.msra.mxu0 %v1655
    %1716 = vmatpush.msra.mxu0 %v1654
    %1717 = vmatpush.msra.mxu0 %v1653
    %1718 = vmatpush.msra.mxu0 %v1652
    %1719 = vmatpush.msra.mxu0 %v1651
    %1720 = vmatpush.msra.mxu0 %v1650
    %1721 = vmatpush.msra.mxu0 %v1649
    %1722 = vmatpush.msra.mxu0 %v1648
    %1723 = vmatpush.msra.mxu0 %v1647
    %1724 = vmatpush.msra.mxu0 %v1646
    %1725 = vmatpush.msra.mxu0 %v1645
    %1726 = vmatmul.f32.gmra.mxu0 %v1611
    %v1727 = vpop.f32.mrf.mxu0
    %v1728 = vadd.f32 %v1708, %v1727
    %1729 = vdwg.mxu0
    %1730 = vmatpush.msra.mxu0 0.0
    %1731 = vmatpush.msra.mxu0 0.0
    %1732 = vmatpush.msra.mxu0 0.0
    %1733 = vmatpush.msra.mxu0 0.0
    %1734 = vmatpush.msra.mxu0 0.0
    %1735 = vmatpush.msra.mxu0 0.0
    %1736 = vmatpush.msra.mxu0 0.0
    %1737 = vmatpush.msra.mxu0 0.0
    %1738 = vmatpush.msra.mxu0 0.0
    %1739 = vmatpush.msra.mxu0 0.0
    %1740 = vmatpush.msra.mxu0 0.0
    %1741 = vmatpush.msra.mxu0 0.0
    %1742 = vmatpush.msra.mxu0 0.0
    %1743 = vmatpush.msra.mxu0 0.0
    %1744 = vmatpush.msra.mxu0 %v1662
    %1745 = vmatpush.msra.mxu0 %v1661
    %1746 = vmatmul.f32.gmra.mxu0 %v1668
    %v1747 = vpop.f32.mrf.mxu0
    %v1748 = vadd.f32 %v1728, %v1747
    %1749 = vdwg.mxu0
    %v1750 = vmul.f32 %v1748, 0.5
    %v1751 = vmul.f32 %v1750, 1.442695
    %v1752 = vpow.pop %v1751
    %1754 = vrot.lane.b32.xlu0 %v1752, 108
    %v1755 = vpop.permute.xlu0 %1754
    %v1757 = vmul.f32 %v54, %v1755
    %v1758 = vadd.f32 %v1757, %v1748
    %v1759 = vpack.c.bf16 %v1758, %v1758
    %v1760 = vld [vmem:[%s6] sm:$0xff]
    %v1761 = vld [vmem:[%s6 + $0x8] sm:$0xff]
    %v1762 = vld [vmem:[%s6 + $0x10] sm:$0xff]
    %v1763 = vld [vmem:[%s6 + $0x18] sm:$0xff]
    %v1764 = vld [vmem:[%s6 + $0x20] sm:$0x33]
    %v1765 = vld [vmem:[%s6 + $0x28] sm:$0x33]
    %v1766 = vld [vmem:[%s7] sm:$0xf]
    %v1768 = vperm.slane %v1766, 0
    %v1769 = vperm.slane %v1766, 1
    %v1770 = vperm.slane %v1766, 2
    %v1771 = vperm.slane %v1766, 3
    %v1782 = vunpack.c.l.b16 %v1760
    %v1783 = vunpack.c.h.b16 %v1760
    %v1784 = vunpack.c.l.b16 %v1761
    %v1785 = vunpack.c.h.b16 %v1761
    %v1786 = vunpack.c.l.b16 %v1762
    %v1787 = vunpack.c.h.b16 %v1762
    %v1788 = vunpack.c.l.b16 %v1763
    %v1789 = vunpack.c.h.b16 %v1763
    %v1790 = vunpack.c.l.b16 %v1764
    %v1791 = vunpack.c.h.b16 %v1764
    %v1792 = vunpack.c.l.b16 %v1765
    %v1793 = vunpack.c.h.b16 %v1765
    %v1794 = vpack.c.b16 %v1786, %v1782
    %v1795 = vpack.c.b16 %v1787, %v1783
    %v1796 = vpack.c.b16 %v1788, %v1784
    %v1797 = vpack.c.b16 %v1789, %v1785
    %v1798 = vpack.c.b16 %v1790, %v1790
    %v1799 = vpack.c.b16 %v1791, %v1791
    %v1800 = vpack.c.b16 %v1792, %v1792
    %v1801 = vpack.c.b16 %v1793, %v1793
    %vm1806 = vcmask 162816
    %v1808 = vsel %vm1806, %v1759, 0
    %vm1810 = vcmask 1041408
    %v1812 = vsel %vm1810, %v1798, 0
    %v1815 = vsel %vm1810, %v1799, 0
    %v1818 = vsel %vm1810, %v1800, 0
    %v1821 = vsel %vm1810, %v1801, 0
    %1823 = vmatpush.bf16.msra.mxu0 0
    %1824 = vmatpush.bf16.msra.mxu0 0
    %1825 = vmatpush.bf16.msra.mxu0 0
    %1826 = vmatpush.bf16.msra.mxu0 0
    %1827 = vmatpush.bf16.msra.mxu0 0
    %1828 = vmatpush.bf16.msra.mxu0 0
    %1829 = vmatpush.bf16.msra.mxu0 %v1812
    %1830 = vmatpush.bf16.msra.mxu0 %v1794
    %1831 = vmatmul.bf16.gmra.mxu0 %v1808
    %v1832 = vpop.f32.mrf.mxu0
    %v1833 = vadd.f32 %v1768, %v1832
    %v1834 = vpop.f32.mrf.mxu0
    %1835 = vdwg.mxu0
    %1836 = vmatpush.bf16.msra.mxu0 0
    %1837 = vmatpush.bf16.msra.mxu0 0
    %1838 = vmatpush.bf16.msra.mxu0 0
    %1839 = vmatpush.bf16.msra.mxu0 0
    %1840 = vmatpush.bf16.msra.mxu0 0
    %1841 = vmatpush.bf16.msra.mxu0 0
    %1842 = vmatpush.bf16.msra.mxu0 %v1815
    %1843 = vmatpush.bf16.msra.mxu0 %v1795
    %1844 = vmatmul.bf16.gmra.mxu0 %v1808
    %v1845 = vpop.f32.mrf.mxu0
    %v1846 = vadd.f32 %v1769, %v1845
    %v1847 = vpop.f32.mrf.mxu0
    %1848 = vdwg.mxu0
    %1849 = vmatpush.bf16.msra.mxu0 0
    %1850 = vmatpush.bf16.msra.mxu0 0
    %1851 = vmatpush.bf16.msra.mxu0 0
    %1852 = vmatpush.bf16.msra.mxu0 0
    %1853 = vmatpush.bf16.msra.mxu0 0
    %1854 = vmatpush.bf16.msra.mxu0 0
    %1855 = vmatpush.bf16.msra.mxu0 %v1818
    %1856 = vmatpush.bf16.msra.mxu0 %v1796
    %1857 = vmatmul.bf16.gmra.mxu0 %v1808
    %v1858 = vpop.f32.mrf.mxu0
    %v1859 = vadd.f32 %v1770, %v1858
    %v1860 = vpop.f32.mrf.mxu0
    %1861 = vdwg.mxu0
    %1862 = vmatpush.bf16.msra.mxu0 0
    %1863 = vmatpush.bf16.msra.mxu0 0
    %1864 = vmatpush.bf16.msra.mxu0 0
    %1865 = vmatpush.bf16.msra.mxu0 0
    %1866 = vmatpush.bf16.msra.mxu0 0
    %1867 = vmatpush.bf16.msra.mxu0 0
    %1868 = vmatpush.bf16.msra.mxu0 %v1821
    %1869 = vmatpush.bf16.msra.mxu0 %v1797
    %1870 = vmatmul.bf16.gmra.mxu0 %v1808
    %v1871 = vpop.f32.mrf.mxu0
    %v1872 = vadd.f32 %v1771, %v1871
    %v1873 = vpop.f32.mrf.mxu0
    %1874 = vdwg.mxu0
    %v1875 = vmax.f32 %v1833, 0.0
    %v1876 = vmax.f32 %v1846, 0.0
    %v1877 = vmax.f32 %v1859, 0.0
    %v1878 = vmax.f32 %v1872, 0.0
    %v1879 = vpack.c.bf16 %v1875, %v1875
    %v1880 = vpack.c.bf16 %v1876, %v1876
    %v1881 = vpack.c.bf16 %v1877, %v1877
    %v1882 = vpack.c.bf16 %v1878, %v1878
    %v1883 = vld [vmem:[%s8] sm:$0xff]
    %v1884 = vld [vmem:[%s8 + $0x8] sm:$0xff]
    %v1885 = vld [vmem:[%s8 + $0x10] sm:$0xff]
    %v1886 = vld [vmem:[%s8 + $0x18] sm:$0xf]
    %v1887 = vld [vmem:[%s8 + $0x1c] sm:$0xff]
    %v1888 = vld [vmem:[%s8 + $0x24] sm:$0xff]
    %v1889 = vld [vmem:[%s8 + $0x2c] sm:$0xff]
    %v1890 = vld [vmem:[%s8 + $0x34] sm:$0xf]
    %v1891 = vld [vmem:[%s8 + $0x38] sm:$0xff]
    %v1892 = vld [vmem:[%s8 + $0x40] sm:$0xff]
    %v1893 = vld [vmem:[%s8 + $0x48] sm:$0xff]
    %v1894 = vld [vmem:[%s8 + $0x50] sm:$0xf]
    %v1895 = vld [vmem:[%s8 + $0x54] sm:$0xff]
    %v1896 = vld [vmem:[%s8 + $0x5c] sm:$0xff]
    %v1897 = vld [vmem:[%s8 + $0x64] sm:$0xff]
    %v1898 = vld [vmem:[%s8 + $0x6c] sm:$0xf]
    %v1899 = vld [vmem:[%s8 + $0x70] sm:$0xff]
    %v1900 = vld [vmem:[%s8 + $0x78] sm:$0xff]
    %v1901 = vld [vmem:[%s8 + $0x80] sm:$0xff]
    %v1902 = vld [vmem:[%s8 + $0x88] sm:$0xf]
    %v1903 = vld [vmem:[%s8 + $0x8c] sm:$0xff]
    %v1904 = vld [vmem:[%s8 + $0x94] sm:$0xff]
    %v1905 = vld [vmem:[%s8 + $0x9c] sm:$0xff]
    %v1906 = vld [vmem:[%s8 + $0xa4] sm:$0xf]
    %v1907 = vld [vmem:[%s8 + $0xa8] sm:$0xff]
    %v1908 = vld [vmem:[%s8 + $0xb0] sm:$0xff]
    %v1909 = vld [vmem:[%s8 + $0xb8] sm:$0xff]
    %v1910 = vld [vmem:[%s8 + $0xc0] sm:$0xf]
    %v1911 = vld [vmem:[%s8 + $0xc4] sm:$0xff]
    %v1912 = vld [vmem:[%s8 + $0xcc] sm:$0xff]
    %v1913 = vld [vmem:[%s8 + $0xd4] sm:$0xff]
    %v1914 = vld [vmem:[%s8 + $0xdc] sm:$0xf]
    %v1915 = vld [vmem:[%s8 + $0xe0] sm:$0xff]
    %v1916 = vld [vmem:[%s8 + $0xe8] sm:$0xff]
    %v1917 = vld [vmem:[%s8 + $0xf0] sm:$0xff]
    %v1918 = vld [vmem:[%s8 + $0xf8] sm:$0xf]
    %v1919 = vld [vmem:[%s8 + $0xfc] sm:$0xff]
    %v1920 = vld [vmem:[%s8 + $0x104] sm:$0xff]
    %v1921 = vld [vmem:[%s8 + $0x10c] sm:$0xff]
    %v1922 = vld [vmem:[%s8 + $0x114] sm:$0xf]
    %v1923 = vld [vmem:[%s8 + $0x118] sm:$0xff]
    %v1924 = vld [vmem:[%s8 + $0x120] sm:$0xff]
    %v1925 = vld [vmem:[%s8 + $0x128] sm:$0xff]
    %v1926 = vld [vmem:[%s8 + $0x130] sm:$0xf]
    %v1927 = vld [vmem:[%s8 + $0x134] sm:$0xff]
    %v1928 = vld [vmem:[%s8 + $0x13c] sm:$0xff]
    %v1929 = vld [vmem:[%s8 + $0x144] sm:$0xff]
    %v1930 = vld [vmem:[%s8 + $0x14c] sm:$0xf]
    %v1931 = vld [vmem:[%s8 + $0x150] sm:$0xff]
    %v1932 = vld [vmem:[%s8 + $0x158] sm:$0xff]
    %v1933 = vld [vmem:[%s8 + $0x160] sm:$0xff]
    %v1934 = vld [vmem:[%s8 + $0x168] sm:$0xf]
    %v1935 = vld [vmem:[%s8 + $0x16c] sm:$0xff]
    %v1936 = vld [vmem:[%s8 + $0x174] sm:$0xff]
    %v1937 = vld [vmem:[%s8 + $0x17c] sm:$0xff]
    %v1938 = vld [vmem:[%s8 + $0x184] sm:$0xf]
    %v1939 = vld [vmem:[%s8 + $0x188] sm:$0xff]
    %v1940 = vld [vmem:[%s8 + $0x190] sm:$0xff]
    %v1941 = vld [vmem:[%s8 + $0x198] sm:$0xff]
    %v1942 = vld [vmem:[%s8 + $0x1a0] sm:$0xf]
    %v1943 = vld [vmem:[%s8 + $0x1a4] sm:$0xff]
    %v1944 = vld [vmem:[%s8 + $0x1ac] sm:$0xff]
    %v1945 = vld [vmem:[%s8 + $0x1b4] sm:$0xff]
    %v1946 = vld [vmem:[%s8 + $0x1bc] sm:$0xf]
    %v1947 = vld [vmem:[%s8 + $0x1c0] sm:$0xff]
    %v1948 = vld [vmem:[%s8 + $0x1c8] sm:$0xff]
    %v1949 = vld [vmem:[%s8 + $0x1d0] sm:$0xff]
    %v1950 = vld [vmem:[%s8 + $0x1d8] sm:$0xf]
    %v1951 = vld [vmem:[%s8 + $0x1dc] sm:$0xff]
    %v1952 = vld [vmem:[%s8 + $0x1e4] sm:$0xff]
    %v1953 = vld [vmem:[%s8 + $0x1ec] sm:$0xff]
    %v1954 = vld [vmem:[%s8 + $0x1f4] sm:$0xf]
    %v1955 = vld [vmem:[%s8 + $0x1f8] sm:$0xff]
    %v1956 = vld [vmem:[%s8 + $0x200] sm:$0xff]
    %v1957 = vld [vmem:[%s8 + $0x208] sm:$0xff]
    %v1958 = vld [vmem:[%s8 + $0x210] sm:$0xf]
    %v1959 = vld [vmem:[%s8 + $0x214] sm:$0xff]
    %v1960 = vld [vmem:[%s8 + $0x21c] sm:$0xff]
    %v1961 = vld [vmem:[%s8 + $0x224] sm:$0xff]
    %v1962 = vld [vmem:[%s8 + $0x22c] sm:$0xf]
    %v1963 = vld [vmem:[%s8 + $0x230] sm:$0xff]
    %v1964 = vld [vmem:[%s8 + $0x238] sm:$0xff]
    %v1965 = vld [vmem:[%s8 + $0x240] sm:$0xff]
    %v1966 = vld [vmem:[%s8 + $0x248] sm:$0xf]
    %v1967 = vld [vmem:[%s8 + $0x24c] sm:$0xff]
    %v1968 = vld [vmem:[%s8 + $0x254] sm:$0xff]
    %v1969 = vld [vmem:[%s8 + $0x25c] sm:$0xff]
    %v1970 = vld [vmem:[%s8 + $0x264] sm:$0xf]
    %v1971 = vld [vmem:[%s8 + $0x268] sm:$0xff]
    %v1972 = vld [vmem:[%s8 + $0x270] sm:$0xff]
    %v1973 = vld [vmem:[%s8 + $0x278] sm:$0xff]
    %v1974 = vld [vmem:[%s8 + $0x280] sm:$0xf]
    %v1975 = vld [vmem:[%s8 + $0x284] sm:$0xff]
    %v1976 = vld [vmem:[%s8 + $0x28c] sm:$0xff]
    %v1977 = vld [vmem:[%s8 + $0x294] sm:$0xff]
    %v1978 = vld [vmem:[%s8 + $0x29c] sm:$0xf]
    %v1979 = vld [vmem:[%s8 + $0x2a0] sm:$0xff]
    %v1980 = vld [vmem:[%s8 + $0x2a8] sm:$0xff]
    %v1981 = vld [vmem:[%s8 + $0x2b0] sm:$0xff]
    %v1982 = vld [vmem:[%s8 + $0x2b8] sm:$0xf]
    %v1983 = vld [vmem:[%s8 + $0x2bc] sm:$0xff]
    %v1984 = vld [vmem:[%s8 + $0x2c4] sm:$0xff]
    %v1985 = vld [vmem:[%s8 + $0x2cc] sm:$0xff]
    %v1986 = vld [vmem:[%s8 + $0x2d4] sm:$0xf]
    %v1987 = vld [vmem:[%s8 + $0x2d8] sm:$0xff]
    %v1988 = vld [vmem:[%s8 + $0x2e0] sm:$0xff]
    %v1989 = vld [vmem:[%s8 + $0x2e8] sm:$0xff]
    %v1990 = vld [vmem:[%s8 + $0x2f0] sm:$0xf]
    %v1991 = vld [vmem:[%s8 + $0x2f4] sm:$0xff]
    %v1992 = vld [vmem:[%s8 + $0x2fc] sm:$0xff]
    %v1993 = vld [vmem:[%s8 + $0x304] sm:$0xff]
    %v1994 = vld [vmem:[%s8 + $0x30c] sm:$0xf]
    %v1995 = vld [vmem:[%s8 + $0x310] sm:$0xff]
    %v1996 = vld [vmem:[%s8 + $0x318] sm:$0xff]
    %v1997 = vld [vmem:[%s8 + $0x320] sm:$0xff]
    %v1998 = vld [vmem:[%s8 + $0x328] sm:$0xf]
    %v1999 = vld [vmem:[%s8 + $0x32c] sm:$0xff]
    %v2000 = vld [vmem:[%s8 + $0x334] sm:$0xff]
    %v2001 = vld [vmem:[%s8 + $0x33c] sm:$0xff]
    %v2002 = vld [vmem:[%s8 + $0x344] sm:$0xf]
    %v2003 = vld [vmem:[%s8 + $0x348] sm:$0xff]
    %v2004 = vld [vmem:[%s8 + $0x350] sm:$0xff]
    %v2005 = vld [vmem:[%s8 + $0x358] sm:$0xff]
    %v2006 = vld [vmem:[%s8 + $0x360] sm:$0xf]
    %v2007 = vld [vmem:[%s8 + $0x364] sm:$0xff]
    %v2008 = vld [vmem:[%s8 + $0x36c] sm:$0xff]
    %v2009 = vld [vmem:[%s8 + $0x374] sm:$0xff]
    %v2010 = vld [vmem:[%s8 + $0x37c] sm:$0xf]
    %v2011 = vld [vmem:[%s8 + $0x380] sm:$0xff]
    %v2012 = vld [vmem:[%s8 + $0x388] sm:$0xff]
    %v2013 = vld [vmem:[%s8 + $0x390] sm:$0xff]
    %v2014 = vld [vmem:[%s8 + $0x398] sm:$0xf]
    %v2015 = vld [vmem:[%s8 + $0x39c] sm:$0xff]
    %v2016 = vld [vmem:[%s8 + $0x3a4] sm:$0xff]
    %v2017 = vld [vmem:[%s8 + $0x3ac] sm:$0xff]
    %v2018 = vld [vmem:[%s8 + $0x3b4] sm:$0xf]
    %v2019 = vld [vmem:[%s8 + $0x3b8] sm:$0xff]
    %v2020 = vld [vmem:[%s8 + $0x3c0] sm:$0xff]
    %v2021 = vld [vmem:[%s8 + $0x3c8] sm:$0xff]
    %v2022 = vld [vmem:[%s8 + $0x3d0] sm:$0xf]
    %v2023 = vld [vmem:[%s8 + $0x3d4] sm:$0xff]
    %v2024 = vld [vmem:[%s8 + $0x3dc] sm:$0xff]
    %v2025 = vld [vmem:[%s8 + $0x3e4] sm:$0xff]
    %v2026 = vld [vmem:[%s8 + $0x3ec] sm:$0xf]
    %v2027 = vld [vmem:[%s8 + $0x3f0] sm:$0xff]
    %v2028 = vld [vmem:[%s8 + $0x3f8] sm:$0xff]
    %v2029 = vld [vmem:[%s8 + $0x400] sm:$0xff]
    %v2030 = vld [vmem:[%s8 + $0x408] sm:$0xf]
    %v2031 = vld [vmem:[%s8 + $0x40c] sm:$0xff]
    %v2032 = vld [vmem:[%s8 + $0x414] sm:$0xff]
    %v2033 = vld [vmem:[%s8 + $0x41c] sm:$0xff]
    %v2034 = vld [vmem:[%s8 + $0x424] sm:$0xf]
    %v2035 = vld [vmem:[%s8 + $0x428] sm:$0xff]
    %v2036 = vld [vmem:[%s8 + $0x430] sm:$0xff]
    %v2037 = vld [vmem:[%s8 + $0x438] sm:$0xff]
    %v2038 = vld [vmem:[%s8 + $0x440] sm:$0xf]
    %v2039 = vld [vmem:[%s8 + $0x444] sm:$0xff]
    %v2040 = vld [vmem:[%s8 + $0x44c] sm:$0xff]
    %v2041 = vld [vmem:[%s8 + $0x454] sm:$0xff]
    %v2042 = vld [vmem:[%s8 + $0x45c] sm:$0xf]
    %v2043 = vld [vmem:[%s8 + $0x460] sm:$0xff]
    %v2044 = vld [vmem:[%s8 + $0x468] sm:$0xff]
    %v2045 = vld [vmem:[%s8 + $0x470] sm:$0xff]
    %v2046 = vld [vmem:[%s8 + $0x478] sm:$0xf]
    %v2047 = vld [vmem:[%s8 + $0x47c] sm:$0xff]
    %v2048 = vld [vmem:[%s8 + $0x484] sm:$0xff]
    %v2049 = vld [vmem:[%s8 + $0x48c] sm:$0xff]
    %v2050 = vld [vmem:[%s8 + $0x494] sm:$0xf]
    %v2051 = vld [vmem:[%s8 + $0x498] sm:$0xff]
    %v2052 = vld [vmem:[%s8 + $0x4a0] sm:$0xff]
    %v2053 = vld [vmem:[%s8 + $0x4a8] sm:$0xff]
    %v2054 = vld [vmem:[%s8 + $0x4b0] sm:$0xf]
    %v2055 = vld [vmem:[%s8 + $0x4b4] sm:$0xff]
    %v2056 = vld [vmem:[%s8 + $0x4bc] sm:$0xff]
    %v2057 = vld [vmem:[%s8 + $0x4c4] sm:$0xff]
    %v2058 = vld [vmem:[%s8 + $0x4cc] sm:$0xf]
    %v2059 = vld [vmem:[%s8 + $0x4d0] sm:$0xff]
    %v2060 = vld [vmem:[%s8 + $0x4d8] sm:$0xff]
    %v2061 = vld [vmem:[%s8 + $0x4e0] sm:$0xff]
    %v2062 = vld [vmem:[%s8 + $0x4e8] sm:$0xf]
    %v2063 = vld [vmem:[%s8 + $0x4ec] sm:$0xff]
    %v2064 = vld [vmem:[%s8 + $0x4f4] sm:$0xff]
    %v2065 = vld [vmem:[%s8 + $0x4fc] sm:$0xff]
    %v2066 = vld [vmem:[%s8 + $0x504] sm:$0xf]
    %v2067 = vld [vmem:[%s8 + $0x508] sm:$0xff]
    %v2068 = vld [vmem:[%s8 + $0x510] sm:$0xff]
    %v2069 = vld [vmem:[%s8 + $0x518] sm:$0xff]
    %v2070 = vld [vmem:[%s8 + $0x520] sm:$0xf]
    %v2071 = vld [vmem:[%s8 + $0x524] sm:$0xff]
    %v2072 = vld [vmem:[%s8 + $0x52c] sm:$0xff]
    %v2073 = vld [vmem:[%s8 + $0x534] sm:$0xff]
    %v2074 = vld [vmem:[%s8 + $0x53c] sm:$0xf]
    %v2075 = vld [vmem:[%s8 + $0x540] sm:$0xff]
    %v2076 = vld [vmem:[%s8 + $0x548] sm:$0xff]
    %v2077 = vld [vmem:[%s8 + $0x550] sm:$0xff]
    %v2078 = vld [vmem:[%s8 + $0x558] sm:$0xf]
    %v2079 = vld [vmem:[%s8 + $0x55c] sm:$0xff]
    %v2080 = vld [vmem:[%s8 + $0x564] sm:$0xff]
    %v2081 = vld [vmem:[%s8 + $0x56c] sm:$0xff]
    %v2082 = vld [vmem:[%s8 + $0x574] sm:$0xf]
    %v2083 = vld [vmem:[%s9] sm:$0x7f]
    %v2085 = vperm.slane %v2083, 0
    %v2086 = vperm.slane %v2083, 1
    %v2087 = vperm.slane %v2083, 2
    %v2088 = vperm.slane %v2083, 3
    %v2089 = vperm.slane %v2083, 4
    %v2090 = vperm.slane %v2083, 5
    %v2091 = vperm.slane %v2083, 6
    %v2299 = vunpack.c.l.b16 %v1883
    %v2300 = vunpack.c.h.b16 %v1883
    %v2301 = vunpack.c.l.b16 %v1884
    %v2302 = vunpack.c.h.b16 %v1884
    %v2303 = vunpack.c.l.b16 %v1885
    %v2304 = vunpack.c.h.b16 %v1885
    %v2305 = vunpack.c.l.b16 %v1886
    %v2306 = vunpack.c.l.b16 %v1887
    %v2307 = vunpack.c.h.b16 %v1887
    %v2308 = vunpack.c.l.b16 %v1888
    %v2309 = vunpack.c.h.b16 %v1888
    %v2310 = vunpack.c.l.b16 %v1889
    %v2311 = vunpack.c.h.b16 %v1889
    %v2312 = vunpack.c.l.b16 %v1890
    %v2313 = vunpack.c.l.b16 %v1891
    %v2314 = vunpack.c.h.b16 %v1891
    %v2315 = vunpack.c.l.b16 %v1892
    %v2316 = vunpack.c.h.b16 %v1892
    %v2317 = vunpack.c.l.b16 %v1893
    %v2318 = vunpack.c.h.b16 %v1893
    %v2319 = vunpack.c.l.b16 %v1894
    %v2320 = vunpack.c.l.b16 %v1895
    %v2321 = vunpack.c.h.b16 %v1895
    %v2322 = vunpack.c.l.b16 %v1896
    %v2323 = vunpack.c.h.b16 %v1896
    %v2324 = vunpack.c.l.b16 %v1897
    %v2325 = vunpack.c.h.b16 %v1897
    %v2326 = vunpack.c.l.b16 %v1898
    %v2327 = vunpack.c.l.b16 %v1899
    %v2328 = vunpack.c.h.b16 %v1899
    %v2329 = vunpack.c.l.b16 %v1900
    %v2330 = vunpack.c.h.b16 %v1900
    %v2331 = vunpack.c.l.b16 %v1901
    %v2332 = vunpack.c.h.b16 %v1901
    %v2333 = vunpack.c.l.b16 %v1902
    %v2334 = vunpack.c.l.b16 %v1903
    %v2335 = vunpack.c.h.b16 %v1903
    %v2336 = vunpack.c.l.b16 %v1904
    %v2337 = vunpack.c.h.b16 %v1904
    %v2338 = vunpack.c.l.b16 %v1905
    %v2339 = vunpack.c.h.b16 %v1905
    %v2340 = vunpack.c.l.b16 %v1906
    %v2341 = vunpack.c.l.b16 %v1907
    %v2342 = vunpack.c.h.b16 %v1907
    %v2343 = vunpack.c.l.b16 %v1908
    %v2344 = vunpack.c.h.b16 %v1908
    %v2345 = vunpack.c.l.b16 %v1909
    %v2346 = vunpack.c.h.b16 %v1909
    %v2347 = vunpack.c.l.b16 %v1910
    %v2348 = vunpack.c.l.b16 %v1911
    %v2349 = vunpack.c.h.b16 %v1911
    %v2350 = vunpack.c.l.b16 %v1912
    %v2351 = vunpack.c.h.b16 %v1912
    %v2352 = vunpack.c.l.b16 %v1913
    %v2353 = vunpack.c.h.b16 %v1913
    %v2354 = vunpack.c.l.b16 %v1914
    %v2355 = vunpack.c.l.b16 %v1915
    %v2356 = vunpack.c.h.b16 %v1915
    %v2357 = vunpack.c.l.b16 %v1916
    %v2358 = vunpack.c.h.b16 %v1916
    %v2359 = vunpack.c.l.b16 %v1917
    %v2360 = vunpack.c.h.b16 %v1917
    %v2361 = vunpack.c.l.b16 %v1918
    %v2362 = vunpack.c.l.b16 %v1919
    %v2363 = vunpack.c.h.b16 %v1919
    %v2364 = vunpack.c.l.b16 %v1920
    %v2365 = vunpack.c.h.b16 %v1920
    %v2366 = vunpack.c.l.b16 %v1921
    %v2367 = vunpack.c.h.b16 %v1921
    %v2368 = vunpack.c.l.b16 %v1922
    %v2369 = vunpack.c.l.b16 %v1923
    %v2370 = vunpack.c.h.b16 %v1923
    %v2371 = vunpack.c.l.b16 %v1924
    %v2372 = vunpack.c.h.b16 %v1924
    %v2373 = vunpack.c.l.b16 %v1925
    %v2374 = vunpack.c.h.b16 %v1925
    %v2375 = vunpack.c.l.b16 %v1926
    %v2376 = vunpack.c.l.b16 %v1927
    %v2377 = vunpack.c.h.b16 %v1927
    %v2378 = vunpack.c.l.b16 %v1928
    %v2379 = vunpack.c.h.b16 %v1928
    %v2380 = vunpack.c.l.b16 %v1929
    %v2381 = vunpack.c.h.b16 %v1929
    %v2382 = vunpack.c.l.b16 %v1930
    %v2383 = vunpack.c.l.b16 %v1931
    %v2384 = vunpack.c.h.b16 %v1931
    %v2385 = vunpack.c.l.b16 %v1932
    %v2386 = vunpack.c.h.b16 %v1932
    %v2387 = vunpack.c.l.b16 %v1933
    %v2388 = vunpack.c.h.b16 %v1933
    %v2389 = vunpack.c.l.b16 %v1934
    %v2390 = vunpack.c.l.b16 %v1935
    %v2391 = vunpack.c.h.b16 %v1935
    %v2392 = vunpack.c.l.b16 %v1936
    %v2393 = vunpack.c.h.b16 %v1936
    %v2394 = vunpack.c.l.b16 %v1937
    %v2395 = vunpack.c.h.b16 %v1937
    %v2396 = vunpack.c.l.b16 %v1938
    %v2397 = vunpack.c.l.b16 %v1939
    %v2398 = vunpack.c.h.b16 %v1939
    %v2399 = vunpack.c.l.b16 %v1940
    %v2400 = vunpack.c.h.b16 %v1940
    %v2401 = vunpack.c.l.b16 %v1941
    %v2402 = vunpack.c.h.b16 %v1941
    %v2403 = vunpack.c.l.b16 %v1942
    %v2404 = vunpack.c.l.b16 %v1943
    %v2405 = vunpack.c.h.b16 %v1943
    %v2406 = vunpack.c.l.b16 %v1944
    %v2407 = vunpack.c.h.b16 %v1944
    %v2408 = vunpack.c.l.b16 %v1945
    %v2409 = vunpack.c.h.b16 %v1945
    %v2410 = vunpack.c.l.b16 %v1946
    %v2411 = vunpack.c.l.b16 %v1947
    %v2412 = vunpack.c.h.b16 %v1947
    %v2413 = vunpack.c.l.b16 %v1948
    %v2414 = vunpack.c.h.b16 %v1948
    %v2415 = vunpack.c.l.b16 %v1949
    %v2416 = vunpack.c.h.b16 %v1949
    %v2417 = vunpack.c.l.b16 %v1950
    %v2418 = vunpack.c.l.b16 %v1951
    %v2419 = vunpack.c.h.b16 %v1951
    %v2420 = vunpack.c.l.b16 %v1952
    %v2421 = vunpack.c.h.b16 %v1952
    %v2422 = vunpack.c.l.b16 %v1953
    %v2423 = vunpack.c.h.b16 %v1953
    %v2424 = vunpack.c.l.b16 %v1954
    %v2425 = vunpack.c.l.b16 %v1955
    %v2426 = vunpack.c.h.b16 %v1955
    %v2427 = vunpack.c.l.b16 %v1956
    %v2428 = vunpack.c.h.b16 %v1956
    %v2429 = vunpack.c.l.b16 %v1957
    %v2430 = vunpack.c.h.b16 %v1957
    %v2431 = vunpack.c.l.b16 %v1958
    %v2432 = vunpack.c.l.b16 %v1959
    %v2433 = vunpack.c.h.b16 %v1959
    %v2434 = vunpack.c.l.b16 %v1960
    %v2435 = vunpack.c.h.b16 %v1960
    %v2436 = vunpack.c.l.b16 %v1961
    %v2437 = vunpack.c.h.b16 %v1961
    %v2438 = vunpack.c.l.b16 %v1962
    %v2439 = vunpack.c.l.b16 %v1963
    %v2440 = vunpack.c.h.b16 %v1963
    %v2441 = vunpack.c.l.b16 %v1964
    %v2442 = vunpack.c.h.b16 %v1964
    %v2443 = vunpack.c.l.b16 %v1965
    %v2444 = vunpack.c.h.b16 %v1965
    %v2445 = vunpack.c.l.b16 %v1966
    %v2446 = vunpack.c.l.b16 %v1967
    %v2447 = vunpack.c.h.b16 %v1967
    %v2448 = vunpack.c.l.b16 %v1968
    %v2449 = vunpack.c.h.b16 %v1968
    %v2450 = vunpack.c.l.b16 %v1969
    %v2451 = vunpack.c.h.b16 %v1969
    %v2452 = vunpack.c.l.b16 %v1970
    %v2453 = vunpack.c.l.b16 %v1971
    %v2454 = vunpack.c.h.b16 %v1971
    %v2455 = vunpack.c.l.b16 %v1972
    %v2456 = vunpack.c.h.b16 %v1972
    %v2457 = vunpack.c.l.b16 %v1973
    %v2458 = vunpack.c.h.b16 %v1973
    %v2459 = vunpack.c.l.b16 %v1974
    %v2460 = vunpack.c.l.b16 %v1975
    %v2461 = vunpack.c.h.b16 %v1975
    %v2462 = vunpack.c.l.b16 %v1976
    %v2463 = vunpack.c.h.b16 %v1976
    %v2464 = vunpack.c.l.b16 %v1977
    %v2465 = vunpack.c.h.b16 %v1977
    %v2466 = vunpack.c.l.b16 %v1978
    %v2467 = vunpack.c.l.b16 %v1979
    %v2468 = vunpack.c.h.b16 %v1979
    %v2469 = vunpack.c.l.b16 %v1980
    %v2470 = vunpack.c.h.b16 %v1980
    %v2471 = vunpack.c.l.b16 %v1981
    %v2472 = vunpack.c.h.b16 %v1981
    %v2473 = vunpack.c.l.b16 %v1982
    %v2474 = vunpack.c.l.b16 %v1983
    %v2475 = vunpack.c.h.b16 %v1983
    %v2476 = vunpack.c.l.b16 %v1984
    %v2477 = vunpack.c.h.b16 %v1984
    %v2478 = vunpack.c.l.b16 %v1985
    %v2479 = vunpack.c.h.b16 %v1985
    %v2480 = vunpack.c.l.b16 %v1986
    %v2481 = vunpack.c.l.b16 %v1987
    %v2482 = vunpack.c.h.b16 %v1987
    %v2483 = vunpack.c.l.b16 %v1988
    %v2484 = vunpack.c.h.b16 %v1988
    %v2485 = vunpack.c.l.b16 %v1989
    %v2486 = vunpack.c.h.b16 %v1989
    %v2487 = vunpack.c.l.b16 %v1990
    %v2488 = vunpack.c.l.b16 %v1991
    %v2489 = vunpack.c.h.b16 %v1991
    %v2490 = vunpack.c.l.b16 %v1992
    %v2491 = vunpack.c.h.b16 %v1992
    %v2492 = vunpack.c.l.b16 %v1993
    %v2493 = vunpack.c.h.b16 %v1993
    %v2494 = vunpack.c.l.b16 %v1994
    %v2495 = vunpack.c.l.b16 %v1995
    %v2496 = vunpack.c.h.b16 %v1995
    %v2497 = vunpack.c.l.b16 %v1996
    %v2498 = vunpack.c.h.b16 %v1996
    %v2499 = vunpack.c.l.b16 %v1997
    %v2500 = vunpack.c.h.b16 %v1997
    %v2501 = vunpack.c.l.b16 %v1998
    %v2502 = vunpack.c.l.b16 %v1999
    %v2503 = vunpack.c.h.b16 %v1999
    %v2504 = vunpack.c.l.b16 %v2000
    %v2505 = vunpack.c.h.b16 %v2000
    %v2506 = vunpack.c.l.b16 %v2001
    %v2507 = vunpack.c.h.b16 %v2001
    %v2508 = vunpack.c.l.b16 %v2002
    %v2509 = vunpack.c.l.b16 %v2003
    %v2510 = vunpack.c.h.b16 %v2003
    %v2511 = vunpack.c.l.b16 %v2004
    %v2512 = vunpack.c.h.b16 %v2004
    %v2513 = vunpack.c.l.b16 %v2005
    %v2514 = vunpack.c.h.b16 %v2005
    %v2515 = vunpack.c.l.b16 %v2006
    %v2516 = vunpack.c.l.b16 %v2007
    %v2517 = vunpack.c.h.b16 %v2007
    %v2518 = vunpack.c.l.b16 %v2008
    %v2519 = vunpack.c.h.b16 %v2008
    %v2520 = vunpack.c.l.b16 %v2009
    %v2521 = vunpack.c.h.b16 %v2009
    %v2522 = vunpack.c.l.b16 %v2010
    %v2523 = vunpack.c.l.b16 %v2011
    %v2524 = vunpack.c.h.b16 %v2011
    %v2525 = vunpack.c.l.b16 %v2012
    %v2526 = vunpack.c.h.b16 %v2012
    %v2527 = vunpack.c.l.b16 %v2013
    %v2528 = vunpack.c.h.b16 %v2013
    %v2529 = vunpack.c.l.b16 %v2014
    %v2530 = vunpack.c.l.b16 %v2015
    %v2531 = vunpack.c.h.b16 %v2015
    %v2532 = vunpack.c.l.b16 %v2016
    %v2533 = vunpack.c.h.b16 %v2016
    %v2534 = vunpack.c.l.b16 %v2017
    %v2535 = vunpack.c.h.b16 %v2017
    %v2536 = vunpack.c.l.b16 %v2018
    %v2537 = vunpack.c.l.b16 %v2019
    %v2538 = vunpack.c.h.b16 %v2019
    %v2539 = vunpack.c.l.b16 %v2020
    %v2540 = vunpack.c.h.b16 %v2020
    %v2541 = vunpack.c.l.b16 %v2021
    %v2542 = vunpack.c.h.b16 %v2021
    %v2543 = vunpack.c.l.b16 %v2022
    %v2544 = vunpack.c.l.b16 %v2023
    %v2545 = vunpack.c.h.b16 %v2023
    %v2546 = vunpack.c.l.b16 %v2024
    %v2547 = vunpack.c.h.b16 %v2024
    %v2548 = vunpack.c.l.b16 %v2025
    %v2549 = vunpack.c.h.b16 %v2025
    %v2550 = vunpack.c.l.b16 %v2026
    %v2551 = vunpack.c.l.b16 %v2027
    %v2552 = vunpack.c.h.b16 %v2027
    %v2553 = vunpack.c.l.b16 %v2028
    %v2554 = vunpack.c.h.b16 %v2028
    %v2555 = vunpack.c.l.b16 %v2029
    %v2556 = vunpack.c.h.b16 %v2029
    %v2557 = vunpack.c.l.b16 %v2030
    %v2558 = vunpack.c.l.b16 %v2031
    %v2559 = vunpack.c.h.b16 %v2031
    %v2560 = vunpack.c.l.b16 %v2032
    %v2561 = vunpack.c.h.b16 %v2032
    %v2562 = vunpack.c.l.b16 %v2033
    %v2563 = vunpack.c.h.b16 %v2033
    %v2564 = vunpack.c.l.b16 %v2034
    %v2565 = vunpack.c.l.b16 %v2035
    %v2566 = vunpack.c.h.b16 %v2035
    %v2567 = vunpack.c.l.b16 %v2036
    %v2568 = vunpack.c.h.b16 %v2036
    %v2569 = vunpack.c.l.b16 %v2037
    %v2570 = vunpack.c.h.b16 %v2037
    %v2571 = vunpack.c.l.b16 %v2038
    %v2572 = vunpack.c.l.b16 %v2039
    %v2573 = vunpack.c.h.b16 %v2039
    %v2574 = vunpack.c.l.b16 %v2040
    %v2575 = vunpack.c.h.b16 %v2040
    %v2576 = vunpack.c.l.b16 %v2041
    %v2577 = vunpack.c.h.b16 %v2041
    %v2578 = vunpack.c.l.b16 %v2042
    %v2579 = vunpack.c.l.b16 %v2043
    %v2580 = vunpack.c.h.b16 %v2043
    %v2581 = vunpack.c.l.b16 %v2044
    %v2582 = vunpack.c.h.b16 %v2044
    %v2583 = vunpack.c.l.b16 %v2045
    %v2584 = vunpack.c.h.b16 %v2045
    %v2585 = vunpack.c.l.b16 %v2046
    %v2586 = vunpack.c.l.b16 %v2047
    %v2587 = vunpack.c.h.b16 %v2047
    %v2588 = vunpack.c.l.b16 %v2048
    %v2589 = vunpack.c.h.b16 %v2048
    %v2590 = vunpack.c.l.b16 %v2049
    %v2591 = vunpack.c.h.b16 %v2049
    %v2592 = vunpack.c.l.b16 %v2050
    %v2593 = vunpack.c.l.b16 %v2051
    %v2594 = vunpack.c.h.b16 %v2051
    %v2595 = vunpack.c.l.b16 %v2052
    %v2596 = vunpack.c.h.b16 %v2052
    %v2597 = vunpack.c.l.b16 %v2053
    %v2598 = vunpack.c.h.b16 %v2053
    %v2599 = vunpack.c.l.b16 %v2054
    %v2600 = vunpack.c.l.b16 %v2055
    %v2601 = vunpack.c.h.b16 %v2055
    %v2602 = vunpack.c.l.b16 %v2056
    %v2603 = vunpack.c.h.b16 %v2056
    %v2604 = vunpack.c.l.b16 %v2057
    %v2605 = vunpack.c.h.b16 %v2057
    %v2606 = vunpack.c.l.b16 %v2058
    %v2607 = vunpack.c.l.b16 %v2059
    %v2608 = vunpack.c.h.b16 %v2059
    %v2609 = vunpack.c.l.b16 %v2060
    %v2610 = vunpack.c.h.b16 %v2060
    %v2611 = vunpack.c.l.b16 %v2061
    %v2612 = vunpack.c.h.b16 %v2061
    %v2613 = vunpack.c.l.b16 %v2062
    %v2614 = vunpack.c.l.b16 %v2063
    %v2615 = vunpack.c.h.b16 %v2063
    %v2616 = vunpack.c.l.b16 %v2064
    %v2617 = vunpack.c.h.b16 %v2064
    %v2618 = vunpack.c.l.b16 %v2065
    %v2619 = vunpack.c.h.b16 %v2065
    %v2620 = vunpack.c.l.b16 %v2066
    %v2621 = vunpack.c.l.b16 %v2067
    %v2622 = vunpack.c.h.b16 %v2067
    %v2623 = vunpack.c.l.b16 %v2068
    %v2624 = vunpack.c.h.b16 %v2068
    %v2625 = vunpack.c.l.b16 %v2069
    %v2626 = vunpack.c.h.b16 %v2069
    %v2627 = vunpack.c.l.b16 %v2070
    %v2628 = vunpack.c.l.b16 %v2071
    %v2629 = vunpack.c.h.b16 %v2071
    %v2630 = vunpack.c.l.b16 %v2072
    %v2631 = vunpack.c.h.b16 %v2072
    %v2632 = vunpack.c.l.b16 %v2073
    %v2633 = vunpack.c.h.b16 %v2073
    %v2634 = vunpack.c.l.b16 %v2074
    %v2635 = vunpack.c.l.b16 %v2075
    %v2636 = vunpack.c.h.b16 %v2075
    %v2637 = vunpack.c.l.b16 %v2076
    %v2638 = vunpack.c.h.b16 %v2076
    %v2639 = vunpack.c.l.b16 %v2077
    %v2640 = vunpack.c.h.b16 %v2077
    %v2641 = vunpack.c.l.b16 %v2078
    %v2642 = vunpack.c.l.b16 %v2079
    %v2643 = vunpack.c.h.b16 %v2079
    %v2644 = vunpack.c.l.b16 %v2080
    %v2645 = vunpack.c.h.b16 %v2080
    %v2646 = vunpack.c.l.b16 %v2081
    %v2647 = vunpack.c.h.b16 %v2081
    %v2648 = vunpack.c.l.b16 %v2082
    %v2649 = vpack.c.b16 %v2306, %v2299
    %v2650 = vpack.c.b16 %v2307, %v2300
    %v2651 = vpack.c.b16 %v2308, %v2301
    %v2652 = vpack.c.b16 %v2309, %v2302
    %v2653 = vpack.c.b16 %v2310, %v2303
    %v2654 = vpack.c.b16 %v2311, %v2304
    %v2655 = vpack.c.b16 %v2312, %v2305
    %v2656 = vpack.c.b16 %v2320, %v2313
    %v2657 = vpack.c.b16 %v2321, %v2314
    %v2658 = vpack.c.b16 %v2322, %v2315
    %v2659 = vpack.c.b16 %v2323, %v2316
    %v2660 = vpack.c.b16 %v2324, %v2317
    %v2661 = vpack.c.b16 %v2325, %v2318
    %v2662 = vpack.c.b16 %v2326, %v2319
    %v2663 = vpack.c.b16 %v2334, %v2327
    %v2664 = vpack.c.b16 %v2335, %v2328
    %v2665 = vpack.c.b16 %v2336, %v2329
    %v2666 = vpack.c.b16 %v2337, %v2330
    %v2667 = vpack.c.b16 %v2338, %v2331
    %v2668 = vpack.c.b16 %v2339, %v2332
    %v2669 = vpack.c.b16 %v2340, %v2333
    %v2670 = vpack.c.b16 %v2348, %v2341
    %v2671 = vpack.c.b16 %v2349, %v2342
    %v2672 = vpack.c.b16 %v2350, %v2343
    %v2673 = vpack.c.b16 %v2351, %v2344
    %v2674 = vpack.c.b16 %v2352, %v2345
    %v2675 = vpack.c.b16 %v2353, %v2346
    %v2676 = vpack.c.b16 %v2354, %v2347
    %v2677 = vpack.c.b16 %v2362, %v2355
    %v2678 = vpack.c.b16 %v2363, %v2356
    %v2679 = vpack.c.b16 %v2364, %v2357
    %v2680 = vpack.c.b16 %v2365, %v2358
    %v2681 = vpack.c.b16 %v2366, %v2359
    %v2682 = vpack.c.b16 %v2367, %v2360
    %v2683 = vpack.c.b16 %v2368, %v2361
    %v2684 = vpack.c.b16 %v2376, %v2369
    %v2685 = vpack.c.b16 %v2377, %v2370
    %v2686 = vpack.c.b16 %v2378, %v2371
    %v2687 = vpack.c.b16 %v2379, %v2372
    %v2688 = vpack.c.b16 %v2380, %v2373
    %v2689 = vpack.c.b16 %v2381, %v2374
    %v2690 = vpack.c.b16 %v2382, %v2375
    %v2691 = vpack.c.b16 %v2390, %v2383
    %v2692 = vpack.c.b16 %v2391, %v2384
    %v2693 = vpack.c.b16 %v2392, %v2385
    %v2694 = vpack.c.b16 %v2393, %v2386
    %v2695 = vpack.c.b16 %v2394, %v2387
    %v2696 = vpack.c.b16 %v2395, %v2388
    %v2697 = vpack.c.b16 %v2396, %v2389
    %v2698 = vpack.c.b16 %v2404, %v2397
    %v2699 = vpack.c.b16 %v2405, %v2398
    %v2700 = vpack.c.b16 %v2406, %v2399
    %v2701 = vpack.c.b16 %v2407, %v2400
    %v2702 = vpack.c.b16 %v2408, %v2401
    %v2703 = vpack.c.b16 %v2409, %v2402
    %v2704 = vpack.c.b16 %v2410, %v2403
    %v2705 = vpack.c.b16 %v2418, %v2411
    %v2706 = vpack.c.b16 %v2419, %v2412
    %v2707 = vpack.c.b16 %v2420, %v2413
    %v2708 = vpack.c.b16 %v2421, %v2414
    %v2709 = vpack.c.b16 %v2422, %v2415
    %v2710 = vpack.c.b16 %v2423, %v2416
    %v2711 = vpack.c.b16 %v2424, %v2417
    %v2712 = vpack.c.b16 %v2432, %v2425
    %v2713 = vpack.c.b16 %v2433, %v2426
    %v2714 = vpack.c.b16 %v2434, %v2427
    %v2715 = vpack.c.b16 %v2435, %v2428
    %v2716 = vpack.c.b16 %v2436, %v2429
    %v2717 = vpack.c.b16 %v2437, %v2430
    %v2718 = vpack.c.b16 %v2438, %v2431
    %v2719 = vpack.c.b16 %v2446, %v2439
    %v2720 = vpack.c.b16 %v2447, %v2440
    %v2721 = vpack.c.b16 %v2448, %v2441
    %v2722 = vpack.c.b16 %v2449, %v2442
    %v2723 = vpack.c.b16 %v2450, %v2443
    %v2724 = vpack.c.b16 %v2451, %v2444
    %v2725 = vpack.c.b16 %v2452, %v2445
    %v2726 = vpack.c.b16 %v2460, %v2453
    %v2727 = vpack.c.b16 %v2461, %v2454
    %v2728 = vpack.c.b16 %v2462, %v2455
    %v2729 = vpack.c.b16 %v2463, %v2456
    %v2730 = vpack.c.b16 %v2464, %v2457
    %v2731 = vpack.c.b16 %v2465, %v2458
    %v2732 = vpack.c.b16 %v2466, %v2459
    %v2733 = vpack.c.b16 %v2474, %v2467
    %v2734 = vpack.c.b16 %v2475, %v2468
    %v2735 = vpack.c.b16 %v2476, %v2469
    %v2736 = vpack.c.b16 %v2477, %v2470
    %v2737 = vpack.c.b16 %v2478, %v2471
    %v2738 = vpack.c.b16 %v2479, %v2472
    %v2739 = vpack.c.b16 %v2480, %v2473
    %v2740 = vpack.c.b16 %v2488, %v2481
    %v2741 = vpack.c.b16 %v2489, %v2482
    %v2742 = vpack.c.b16 %v2490, %v2483
    %v2743 = vpack.c.b16 %v2491, %v2484
    %v2744 = vpack.c.b16 %v2492, %v2485
    %v2745 = vpack.c.b16 %v2493, %v2486
    %v2746 = vpack.c.b16 %v2494, %v2487
    %v2747 = vpack.c.b16 %v2502, %v2495
    %v2748 = vpack.c.b16 %v2503, %v2496
    %v2749 = vpack.c.b16 %v2504, %v2497
    %v2750 = vpack.c.b16 %v2505, %v2498
    %v2751 = vpack.c.b16 %v2506, %v2499
    %v2752 = vpack.c.b16 %v2507, %v2500
    %v2753 = vpack.c.b16 %v2508, %v2501
    %v2754 = vpack.c.b16 %v2516, %v2509
    %v2755 = vpack.c.b16 %v2517, %v2510
    %v2756 = vpack.c.b16 %v2518, %v2511
    %v2757 = vpack.c.b16 %v2519, %v2512
    %v2758 = vpack.c.b16 %v2520, %v2513
    %v2759 = vpack.c.b16 %v2521, %v2514
    %v2760 = vpack.c.b16 %v2522, %v2515
    %v2761 = vpack.c.b16 %v2530, %v2523
    %v2762 = vpack.c.b16 %v2531, %v2524
    %v2763 = vpack.c.b16 %v2532, %v2525
    %v2764 = vpack.c.b16 %v2533, %v2526
    %v2765 = vpack.c.b16 %v2534, %v2527
    %v2766 = vpack.c.b16 %v2535, %v2528
    %v2767 = vpack.c.b16 %v2536, %v2529
    %v2768 = vpack.c.b16 %v2544, %v2537
    %v2769 = vpack.c.b16 %v2545, %v2538
    %v2770 = vpack.c.b16 %v2546, %v2539
    %v2771 = vpack.c.b16 %v2547, %v2540
    %v2772 = vpack.c.b16 %v2548, %v2541
    %v2773 = vpack.c.b16 %v2549, %v2542
    %v2774 = vpack.c.b16 %v2550, %v2543
    %v2775 = vpack.c.b16 %v2558, %v2551
    %v2776 = vpack.c.b16 %v2559, %v2552
    %v2777 = vpack.c.b16 %v2560, %v2553
    %v2778 = vpack.c.b16 %v2561, %v2554
    %v2779 = vpack.c.b16 %v2562, %v2555
    %v2780 = vpack.c.b16 %v2563, %v2556
    %v2781 = vpack.c.b16 %v2564, %v2557
    %v2782 = vpack.c.b16 %v2572, %v2565
    %v2783 = vpack.c.b16 %v2573, %v2566
    %v2784 = vpack.c.b16 %v2574, %v2567
    %v2785 = vpack.c.b16 %v2575, %v2568
    %v2786 = vpack.c.b16 %v2576, %v2569
    %v2787 = vpack.c.b16 %v2577, %v2570
    %v2788 = vpack.c.b16 %v2578, %v2571
    %v2789 = vpack.c.b16 %v2586, %v2579
    %v2790 = vpack.c.b16 %v2587, %v2580
    %v2791 = vpack.c.b16 %v2588, %v2581
    %v2792 = vpack.c.b16 %v2589, %v2582
    %v2793 = vpack.c.b16 %v2590, %v2583
    %v2794 = vpack.c.b16 %v2591, %v2584
    %v2795 = vpack.c.b16 %v2592, %v2585
    %v2796 = vpack.c.b16 %v2600, %v2593
    %v2797 = vpack.c.b16 %v2601, %v2594
    %v2798 = vpack.c.b16 %v2602, %v2595
    %v2799 = vpack.c.b16 %v2603, %v2596
    %v2800 = vpack.c.b16 %v2604, %v2597
    %v2801 = vpack.c.b16 %v2605, %v2598
    %v2802 = vpack.c.b16 %v2606, %v2599
    %v2803 = vpack.c.b16 %v2614, %v2607
    %v2804 = vpack.c.b16 %v2615, %v2608
    %v2805 = vpack.c.b16 %v2616, %v2609
    %v2806 = vpack.c.b16 %v2617, %v2610
    %v2807 = vpack.c.b16 %v2618, %v2611
    %v2808 = vpack.c.b16 %v2619, %v2612
    %v2809 = vpack.c.b16 %v2620, %v2613
    %v2810 = vpack.c.b16 %v2628, %v2621
    %v2811 = vpack.c.b16 %v2629, %v2622
    %v2812 = vpack.c.b16 %v2630, %v2623
    %v2813 = vpack.c.b16 %v2631, %v2624
    %v2814 = vpack.c.b16 %v2632, %v2625
    %v2815 = vpack.c.b16 %v2633, %v2626
    %v2816 = vpack.c.b16 %v2634, %v2627
    %v2817 = vpack.c.b16 %v2642, %v2635
    %v2818 = vpack.c.b16 %v2643, %v2636
    %v2819 = vpack.c.b16 %v2644, %v2637
    %v2820 = vpack.c.b16 %v2645, %v2638
    %v2821 = vpack.c.b16 %v2646, %v2639
    %v2822 = vpack.c.b16 %v2647, %v2640
    %v2823 = vpack.c.b16 %v2648, %v2641
    %v3000 = vsel %vm1241, %v1882, 0
    %3002 = vmatpush.bf16.msra.mxu0 %v2698
    %3003 = vmatpush.bf16.msra.mxu0 %v2691
    %3004 = vmatpush.bf16.msra.mxu0 %v2684
    %3005 = vmatpush.bf16.msra.mxu0 %v2677
    %3006 = vmatpush.bf16.msra.mxu0 %v2670
    %3007 = vmatpush.bf16.msra.mxu0 %v2663
    %3008 = vmatpush.bf16.msra.mxu0 %v2656
    %3009 = vmatpush.bf16.msra.mxu0 %v2649
    %3010 = vmatmul.bf16.gmra.mxu0 %v1879
    %v3011 = vpop.f32.mrf.mxu0
    %v3012 = vadd.f32 %v2085, %v3011
    %v3013 = vpop.f32.mrf.mxu0
    %3014 = vdwg.mxu0
    %3015 = vmatpush.bf16.msra.mxu0 %v2754
    %3016 = vmatpush.bf16.msra.mxu0 %v2747
    %3017 = vmatpush.bf16.msra.mxu0 %v2740
    %3018 = vmatpush.bf16.msra.mxu0 %v2733
    %3019 = vmatpush.bf16.msra.mxu0 %v2726
    %3020 = vmatpush.bf16.msra.mxu0 %v2719
    %3021 = vmatpush.bf16.msra.mxu0 %v2712
    %3022 = vmatpush.bf16.msra.mxu0 %v2705
    %3023 = vmatmul.bf16.gmra.mxu0 %v1880
    %v3024 = vpop.f32.mrf.mxu0
    %v3025 = vadd.f32 %v3012, %v3024
    %v3026 = vpop.f32.mrf.mxu0
    %3027 = vdwg.mxu0
    %3028 = vmatpush.bf16.msra.mxu0 %v2810
    %3029 = vmatpush.bf16.msra.mxu0 %v2803
    %3030 = vmatpush.bf16.msra.mxu0 %v2796
    %3031 = vmatpush.bf16.msra.mxu0 %v2789
    %3032 = vmatpush.bf16.msra.mxu0 %v2782
    %3033 = vmatpush.bf16.msra.mxu0 %v2775
    %3034 = vmatpush.bf16.msra.mxu0 %v2768
    %3035 = vmatpush.bf16.msra.mxu0 %v2761
    %3036 = vmatmul.bf16.gmra.mxu0 %v1881
    %v3037 = vpop.f32.mrf.mxu0
    %v3038 = vadd.f32 %v3025, %v3037
    %v3039 = vpop.f32.mrf.mxu0
    %3040 = vdwg.mxu0
    %3041 = vmatpush.bf16.msra.mxu0 0
    %3042 = vmatpush.bf16.msra.mxu0 0
    %3043 = vmatpush.bf16.msra.mxu0 0
    %3044 = vmatpush.bf16.msra.mxu0 0
    %3045 = vmatpush.bf16.msra.mxu0 0
    %3046 = vmatpush.bf16.msra.mxu0 0
    %3047 = vmatpush.bf16.msra.mxu0 0
    %3048 = vmatpush.bf16.msra.mxu0 %v2817
    %3049 = vmatmul.bf16.gmra.mxu0 %v3000
    %v3050 = vpop.f32.mrf.mxu0
    %v3051 = vadd.f32 %v3038, %v3050
    %v3052 = vpop.f32.mrf.mxu0
    %3053 = vdwg.mxu0
    %3054 = vmatpush.bf16.msra.mxu0 %v2699
    %3055 = vmatpush.bf16.msra.mxu0 %v2692
    %3056 = vmatpush.bf16.msra.mxu0 %v2685
    %3057 = vmatpush.bf16.msra.mxu0 %v2678
    %3058 = vmatpush.bf16.msra.mxu0 %v2671
    %3059 = vmatpush.bf16.msra.mxu0 %v2664
    %3060 = vmatpush.bf16.msra.mxu0 %v2657
    %3061 = vmatpush.bf16.msra.mxu0 %v2650
    %3062 = vmatmul.bf16.gmra.mxu0 %v1879
    %v3063 = vpop.f32.mrf.mxu0
    %v3064 = vadd.f32 %v2086, %v3063
    %v3065 = vpop.f32.mrf.mxu0
    %3066 = vdwg.mxu0
    %3067 = vmatpush.bf16.msra.mxu0 %v2755
    %3068 = vmatpush.bf16.msra.mxu0 %v2748
    %3069 = vmatpush.bf16.msra.mxu0 %v2741
    %3070 = vmatpush.bf16.msra.mxu0 %v2734
    %3071 = vmatpush.bf16.msra.mxu0 %v2727
    %3072 = vmatpush.bf16.msra.mxu0 %v2720
    %3073 = vmatpush.bf16.msra.mxu0 %v2713
    %3074 = vmatpush.bf16.msra.mxu0 %v2706
    %3075 = vmatmul.bf16.gmra.mxu0 %v1880
    %v3076 = vpop.f32.mrf.mxu0
    %v3077 = vadd.f32 %v3064, %v3076
    %v3078 = vpop.f32.mrf.mxu0
    %3079 = vdwg.mxu0
    %3080 = vmatpush.bf16.msra.mxu0 %v2811
    %3081 = vmatpush.bf16.msra.mxu0 %v2804
    %3082 = vmatpush.bf16.msra.mxu0 %v2797
    %3083 = vmatpush.bf16.msra.mxu0 %v2790
    %3084 = vmatpush.bf16.msra.mxu0 %v2783
    %3085 = vmatpush.bf16.msra.mxu0 %v2776
    %3086 = vmatpush.bf16.msra.mxu0 %v2769
    %3087 = vmatpush.bf16.msra.mxu0 %v2762
    %3088 = vmatmul.bf16.gmra.mxu0 %v1881
    %v3089 = vpop.f32.mrf.mxu0
    %v3090 = vadd.f32 %v3077, %v3089
    %v3091 = vpop.f32.mrf.mxu0
    %3092 = vdwg.mxu0
    %3093 = vmatpush.bf16.msra.mxu0 0
    %3094 = vmatpush.bf16.msra.mxu0 0
    %3095 = vmatpush.bf16.msra.mxu0 0
    %3096 = vmatpush.bf16.msra.mxu0 0
    %3097 = vmatpush.bf16.msra.mxu0 0
    %3098 = vmatpush.bf16.msra.mxu0 0
    %3099 = vmatpush.bf16.msra.mxu0 0
    %3100 = vmatpush.bf16.msra.mxu0 %v2818
    %3101 = vmatmul.bf16.gmra.mxu0 %v3000
    %v3102 = vpop.f32.mrf.mxu0
    %v3103 = vadd.f32 %v3090, %v3102
    %v3104 = vpop.f32.mrf.mxu0
    %3105 = vdwg.mxu0
    %3106 = vmatpush.bf16.msra.mxu0 %v2700
    %3107 = vmatpush.bf16.msra.mxu0 %v2693
    %3108 = vmatpush.bf16.msra.mxu0 %v2686
    %3109 = vmatpush.bf16.msra.mxu0 %v2679
    %3110 = vmatpush.bf16.msra.mxu0 %v2672
    %3111 = vmatpush.bf16.msra.mxu0 %v2665
    %3112 = vmatpush.bf16.msra.mxu0 %v2658
    %3113 = vmatpush.bf16.msra.mxu0 %v2651
    %3114 = vmatmul.bf16.gmra.mxu0 %v1879
    %v3115 = vpop.f32.mrf.mxu0
    %v3116 = vadd.f32 %v2087, %v3115
    %v3117 = vpop.f32.mrf.mxu0
    %3118 = vdwg.mxu0
    %3119 = vmatpush.bf16.msra.mxu0 %v2756
    %3120 = vmatpush.bf16.msra.mxu0 %v2749
    %3121 = vmatpush.bf16.msra.mxu0 %v2742
    %3122 = vmatpush.bf16.msra.mxu0 %v2735
    %3123 = vmatpush.bf16.msra.mxu0 %v2728
    %3124 = vmatpush.bf16.msra.mxu0 %v2721
    %3125 = vmatpush.bf16.msra.mxu0 %v2714
    %3126 = vmatpush.bf16.msra.mxu0 %v2707
    %3127 = vmatmul.bf16.gmra.mxu0 %v1880
    %v3128 = vpop.f32.mrf.mxu0
    %v3129 = vadd.f32 %v3116, %v3128
    %v3130 = vpop.f32.mrf.mxu0
    %3131 = vdwg.mxu0
    %3132 = vmatpush.bf16.msra.mxu0 %v2812
    %3133 = vmatpush.bf16.msra.mxu0 %v2805
    %3134 = vmatpush.bf16.msra.mxu0 %v2798
    %3135 = vmatpush.bf16.msra.mxu0 %v2791
    %3136 = vmatpush.bf16.msra.mxu0 %v2784
    %3137 = vmatpush.bf16.msra.mxu0 %v2777
    %3138 = vmatpush.bf16.msra.mxu0 %v2770
    %3139 = vmatpush.bf16.msra.mxu0 %v2763
    %3140 = vmatmul.bf16.gmra.mxu0 %v1881
    %v3141 = vpop.f32.mrf.mxu0
    %v3142 = vadd.f32 %v3129, %v3141
    %v3143 = vpop.f32.mrf.mxu0
    %3144 = vdwg.mxu0
    %3145 = vmatpush.bf16.msra.mxu0 0
    %3146 = vmatpush.bf16.msra.mxu0 0
    %3147 = vmatpush.bf16.msra.mxu0 0
    %3148 = vmatpush.bf16.msra.mxu0 0
    %3149 = vmatpush.bf16.msra.mxu0 0
    %3150 = vmatpush.bf16.msra.mxu0 0
    %3151 = vmatpush.bf16.msra.mxu0 0
    %3152 = vmatpush.bf16.msra.mxu0 %v2819
    %3153 = vmatmul.bf16.gmra.mxu0 %v3000
    %v3154 = vpop.f32.mrf.mxu0
    %v3155 = vadd.f32 %v3142, %v3154
    %v3156 = vpop.f32.mrf.mxu0
    %3157 = vdwg.mxu0
    %3158 = vmatpush.bf16.msra.mxu0 %v2701
    %3159 = vmatpush.bf16.msra.mxu0 %v2694
    %3160 = vmatpush.bf16.msra.mxu0 %v2687
    %3161 = vmatpush.bf16.msra.mxu0 %v2680
    %3162 = vmatpush.bf16.msra.mxu0 %v2673
    %3163 = vmatpush.bf16.msra.mxu0 %v2666
    %3164 = vmatpush.bf16.msra.mxu0 %v2659
    %3165 = vmatpush.bf16.msra.mxu0 %v2652
    %3166 = vmatmul.bf16.gmra.mxu0 %v1879
    %v3167 = vpop.f32.mrf.mxu0
    %v3168 = vadd.f32 %v2088, %v3167
    %v3169 = vpop.f32.mrf.mxu0
    %3170 = vdwg.mxu0
    %3171 = vmatpush.bf16.msra.mxu0 %v2757
    %3172 = vmatpush.bf16.msra.mxu0 %v2750
    %3173 = vmatpush.bf16.msra.mxu0 %v2743
    %3174 = vmatpush.bf16.msra.mxu0 %v2736
    %3175 = vmatpush.bf16.msra.mxu0 %v2729
    %3176 = vmatpush.bf16.msra.mxu0 %v2722
    %3177 = vmatpush.bf16.msra.mxu0 %v2715
    %3178 = vmatpush.bf16.msra.mxu0 %v2708
    %3179 = vmatmul.bf16.gmra.mxu0 %v1880
    %v3180 = vpop.f32.mrf.mxu0
    %v3181 = vadd.f32 %v3168, %v3180
    %v3182 = vpop.f32.mrf.mxu0
    %3183 = vdwg.mxu0
    %3184 = vmatpush.bf16.msra.mxu0 %v2813
    %3185 = vmatpush.bf16.msra.mxu0 %v2806
    %3186 = vmatpush.bf16.msra.mxu0 %v2799
    %3187 = vmatpush.bf16.msra.mxu0 %v2792
    %3188 = vmatpush.bf16.msra.mxu0 %v2785
    %3189 = vmatpush.bf16.msra.mxu0 %v2778
    %3190 = vmatpush.bf16.msra.mxu0 %v2771
    %3191 = vmatpush.bf16.msra.mxu0 %v2764
    %3192 = vmatmul.bf16.gmra.mxu0 %v1881
    %v3193 = vpop.f32.mrf.mxu0
    %v3194 = vadd.f32 %v3181, %v3193
    %v3195 = vpop.f32.mrf.mxu0
    %3196 = vdwg.mxu0
    %3197 = vmatpush.bf16.msra.mxu0 0
    %3198 = vmatpush.bf16.msra.mxu0 0
    %3199 = vmatpush.bf16.msra.mxu0 0
    %3200 = vmatpush.bf16.msra.mxu0 0
    %3201 = vmatpush.bf16.msra.mxu0 0
    %3202 = vmatpush.bf16.msra.mxu0 0
    %3203 = vmatpush.bf16.msra.mxu0 0
    %3204 = vmatpush.bf16.msra.mxu0 %v2820
    %3205 = vmatmul.bf16.gmra.mxu0 %v3000
    %v3206 = vpop.f32.mrf.mxu0
    %v3207 = vadd.f32 %v3194, %v3206
    %v3208 = vpop.f32.mrf.mxu0
    %3209 = vdwg.mxu0
    %3210 = vmatpush.bf16.msra.mxu0 %v2702
    %3211 = vmatpush.bf16.msra.mxu0 %v2695
    %3212 = vmatpush.bf16.msra.mxu0 %v2688
    %3213 = vmatpush.bf16.msra.mxu0 %v2681
    %3214 = vmatpush.bf16.msra.mxu0 %v2674
    %3215 = vmatpush.bf16.msra.mxu0 %v2667
    %3216 = vmatpush.bf16.msra.mxu0 %v2660
    %3217 = vmatpush.bf16.msra.mxu0 %v2653
    %3218 = vmatmul.bf16.gmra.mxu0 %v1879
    %v3219 = vpop.f32.mrf.mxu0
    %v3220 = vadd.f32 %v2089, %v3219
    %v3221 = vpop.f32.mrf.mxu0
    %3222 = vdwg.mxu0
    %3223 = vmatpush.bf16.msra.mxu0 %v2758
    %3224 = vmatpush.bf16.msra.mxu0 %v2751
    %3225 = vmatpush.bf16.msra.mxu0 %v2744
    %3226 = vmatpush.bf16.msra.mxu0 %v2737
    %3227 = vmatpush.bf16.msra.mxu0 %v2730
    %3228 = vmatpush.bf16.msra.mxu0 %v2723
    %3229 = vmatpush.bf16.msra.mxu0 %v2716
    %3230 = vmatpush.bf16.msra.mxu0 %v2709
    %3231 = vmatmul.bf16.gmra.mxu0 %v1880
    %v3232 = vpop.f32.mrf.mxu0
    %v3233 = vadd.f32 %v3220, %v3232
    %v3234 = vpop.f32.mrf.mxu0
    %3235 = vdwg.mxu0
    %3236 = vmatpush.bf16.msra.mxu0 %v2814
    %3237 = vmatpush.bf16.msra.mxu0 %v2807
    %3238 = vmatpush.bf16.msra.mxu0 %v2800
    %3239 = vmatpush.bf16.msra.mxu0 %v2793
    %3240 = vmatpush.bf16.msra.mxu0 %v2786
    %3241 = vmatpush.bf16.msra.mxu0 %v2779
    %3242 = vmatpush.bf16.msra.mxu0 %v2772
    %3243 = vmatpush.bf16.msra.mxu0 %v2765
    %3244 = vmatmul.bf16.gmra.mxu0 %v1881
    %v3245 = vpop.f32.mrf.mxu0
    %v3246 = vadd.f32 %v3233, %v3245
    %v3247 = vpop.f32.mrf.mxu0
    %3248 = vdwg.mxu0
    %3249 = vmatpush.bf16.msra.mxu0 0
    %3250 = vmatpush.bf16.msra.mxu0 0
    %3251 = vmatpush.bf16.msra.mxu0 0
    %3252 = vmatpush.bf16.msra.mxu0 0
    %3253 = vmatpush.bf16.msra.mxu0 0
    %3254 = vmatpush.bf16.msra.mxu0 0
    %3255 = vmatpush.bf16.msra.mxu0 0
    %3256 = vmatpush.bf16.msra.mxu0 %v2821
    %3257 = vmatmul.bf16.gmra.mxu0 %v3000
    %v3258 = vpop.f32.mrf.mxu0
    %v3259 = vadd.f32 %v3246, %v3258
    %v3260 = vpop.f32.mrf.mxu0
    %3261 = vdwg.mxu0
    %3262 = vmatpush.bf16.msra.mxu0 %v2703
    %3263 = vmatpush.bf16.msra.mxu0 %v2696
    %3264 = vmatpush.bf16.msra.mxu0 %v2689
    %3265 = vmatpush.bf16.msra.mxu0 %v2682
    %3266 = vmatpush.bf16.msra.mxu0 %v2675
    %3267 = vmatpush.bf16.msra.mxu0 %v2668
    %3268 = vmatpush.bf16.msra.mxu0 %v2661
    %3269 = vmatpush.bf16.msra.mxu0 %v2654
    %3270 = vmatmul.bf16.gmra.mxu0 %v1879
    %v3271 = vpop.f32.mrf.mxu0
    %v3272 = vadd.f32 %v2090, %v3271
    %v3273 = vpop.f32.mrf.mxu0
    %3274 = vdwg.mxu0
    %3275 = vmatpush.bf16.msra.mxu0 %v2759
    %3276 = vmatpush.bf16.msra.mxu0 %v2752
    %3277 = vmatpush.bf16.msra.mxu0 %v2745
    %3278 = vmatpush.bf16.msra.mxu0 %v2738
    %3279 = vmatpush.bf16.msra.mxu0 %v2731
    %3280 = vmatpush.bf16.msra.mxu0 %v2724
    %3281 = vmatpush.bf16.msra.mxu0 %v2717
    %3282 = vmatpush.bf16.msra.mxu0 %v2710
    %3283 = vmatmul.bf16.gmra.mxu0 %v1880
    %v3284 = vpop.f32.mrf.mxu0
    %v3285 = vadd.f32 %v3272, %v3284
    %v3286 = vpop.f32.mrf.mxu0
    %3287 = vdwg.mxu0
    %3288 = vmatpush.bf16.msra.mxu0 %v2815
    %3289 = vmatpush.bf16.msra.mxu0 %v2808
    %3290 = vmatpush.bf16.msra.mxu0 %v2801
    %3291 = vmatpush.bf16.msra.mxu0 %v2794
    %3292 = vmatpush.bf16.msra.mxu0 %v2787
    %3293 = vmatpush.bf16.msra.mxu0 %v2780
    %3294 = vmatpush.bf16.msra.mxu0 %v2773
    %3295 = vmatpush.bf16.msra.mxu0 %v2766
    %3296 = vmatmul.bf16.gmra.mxu0 %v1881
    %v3297 = vpop.f32.mrf.mxu0
    %v3298 = vadd.f32 %v3285, %v3297
    %v3299 = vpop.f32.mrf.mxu0
    %3300 = vdwg.mxu0
    %3301 = vmatpush.bf16.msra.mxu0 0
    %3302 = vmatpush.bf16.msra.mxu0 0
    %3303 = vmatpush.bf16.msra.mxu0 0
    %3304 = vmatpush.bf16.msra.mxu0 0
    %3305 = vmatpush.bf16.msra.mxu0 0
    %3306 = vmatpush.bf16.msra.mxu0 0
    %3307 = vmatpush.bf16.msra.mxu0 0
    %3308 = vmatpush.bf16.msra.mxu0 %v2822
    %3309 = vmatmul.bf16.gmra.mxu0 %v3000
    %v3310 = vpop.f32.mrf.mxu0
    %v3311 = vadd.f32 %v3298, %v3310
    %v3312 = vpop.f32.mrf.mxu0
    %3313 = vdwg.mxu0
    %3314 = vmatpush.bf16.msra.mxu0 %v2704
    %3315 = vmatpush.bf16.msra.mxu0 %v2697
    %3316 = vmatpush.bf16.msra.mxu0 %v2690
    %3317 = vmatpush.bf16.msra.mxu0 %v2683
    %3318 = vmatpush.bf16.msra.mxu0 %v2676
    %3319 = vmatpush.bf16.msra.mxu0 %v2669
    %3320 = vmatpush.bf16.msra.mxu0 %v2662
    %3321 = vmatpush.bf16.msra.mxu0 %v2655
    %3322 = vmatmul.bf16.gmra.mxu0 %v1879
    %v3323 = vpop.f32.mrf.mxu0
    %v3324 = vadd.f32 %v2091, %v3323
    %v3325 = vpop.f32.mrf.mxu0
    %3326 = vdwg.mxu0
    %3327 = vmatpush.bf16.msra.mxu0 %v2760
    %3328 = vmatpush.bf16.msra.mxu0 %v2753
    %3329 = vmatpush.bf16.msra.mxu0 %v2746
    %3330 = vmatpush.bf16.msra.mxu0 %v2739
    %3331 = vmatpush.bf16.msra.mxu0 %v2732
    %3332 = vmatpush.bf16.msra.mxu0 %v2725
    %3333 = vmatpush.bf16.msra.mxu0 %v2718
    %3334 = vmatpush.bf16.msra.mxu0 %v2711
    %3335 = vmatmul.bf16.gmra.mxu0 %v1880
    %v3336 = vpop.f32.mrf.mxu0
    %v3337 = vadd.f32 %v3324, %v3336
    %v3338 = vpop.f32.mrf.mxu0
    %3339 = vdwg.mxu0
    %3340 = vmatpush.bf16.msra.mxu0 %v2816
    %3341 = vmatpush.bf16.msra.mxu0 %v2809
    %3342 = vmatpush.bf16.msra.mxu0 %v2802
    %3343 = vmatpush.bf16.msra.mxu0 %v2795
    %3344 = vmatpush.bf16.msra.mxu0 %v2788
    %3345 = vmatpush.bf16.msra.mxu0 %v2781
    %3346 = vmatpush.bf16.msra.mxu0 %v2774
    %3347 = vmatpush.bf16.msra.mxu0 %v2767
    %3348 = vmatmul.bf16.gmra.mxu0 %v1881
    %v3349 = vpop.f32.mrf.mxu0
    %v3350 = vadd.f32 %v3337, %v3349
    %v3351 = vpop.f32.mrf.mxu0
    %3352 = vdwg.mxu0
    %3353 = vmatpush.bf16.msra.mxu0 0
    %3354 = vmatpush.bf16.msra.mxu0 0
    %3355 = vmatpush.bf16.msra.mxu0 0
    %3356 = vmatpush.bf16.msra.mxu0 0
    %3357 = vmatpush.bf16.msra.mxu0 0
    %3358 = vmatpush.bf16.msra.mxu0 0
    %3359 = vmatpush.bf16.msra.mxu0 0
    %3360 = vmatpush.bf16.msra.mxu0 %v2823
    %3361 = vmatmul.bf16.gmra.mxu0 %v3000
    %v3362 = vpop.f32.mrf.mxu0
    %v3363 = vadd.f32 %v3350, %v3362
    %v3364 = vpop.f32.mrf.mxu0
    %3365 = vdwg.mxu0
    %v3366 = vxor.u32 %v3051, 2147483648
    %v3367 = vxor.u32 %v3103, 2147483648
    %v3368 = vxor.u32 %v3155, 2147483648
    %v3369 = vxor.u32 %v3207, 2147483648
    %v3370 = vxor.u32 %v3259, 2147483648
    %v3371 = vxor.u32 %v3311, 2147483648
    %v3372 = vxor.u32 %v3363, 2147483648
    %v3373 = vmul.f32 %v3366, 1.442695
    %v3374 = vpow.pop %v3373
    %v3375 = vmul.f32 %v3367, 1.442695
    %v3376 = vpow.pop %v3375
    %v3377 = vmul.f32 %v3368, 1.442695
    %v3378 = vpow.pop %v3377
    %v3379 = vmul.f32 %v3369, 1.442695
    %v3380 = vpow.pop %v3379
    %v3381 = vmul.f32 %v3370, 1.442695
    %v3382 = vpow.pop %v3381
    %v3383 = vmul.f32 %v3371, 1.442695
    %v3384 = vpow.pop %v3383
    %v3385 = vmul.f32 %v3372, 1.442695
    %v3386 = vpow.pop %v3385
    %v3387 = vadd.f32 %v3374, 1.0
    %v3388 = vadd.f32 %v3376, 1.0
    %v3389 = vadd.f32 %v3378, 1.0
    %v3390 = vadd.f32 %v3380, 1.0
    %v3391 = vadd.f32 %v3382, 1.0
    %v3392 = vadd.f32 %v3384, 1.0
    %v3393 = vadd.f32 %v3386, 1.0
    %v3394 = vrcp.pop %v3387
    %v3395 = vmul.f32 %v3387, %v3394
    %v3396 = vsub.f32 1.0, %v3395
    %v3397 = vmul.f32 %v3394, %v3396
    %v3398 = vadd.f32 %v3394, %v3397
    %vm3399 = vweird.f32 %v3387
    %vm3400 = vweird.f32 %v3394
    %vm3401 = vmor %vm3399, %vm3400
    %v3402 = vsel %vm3401, %v3394, %v3398
    %v3403 = vand.u32 2147483647, %v3387
    %vm3404 = vcmp.eq.f32.partialorder %v3403, 8.507059e+37
    %v3405 = vand.u32 %v3387, 2147483648
    %v3406 = vor.u32 1.1754944e-38, %v3405
    %v3407 = vsel %vm3404, %v3406, %v3402
    %v3408 = vmul.f32 1.0, %v3407
    %v3409 = vrcp.pop %v3388
    %v3410 = vmul.f32 %v3388, %v3409
    %v3411 = vsub.f32 1.0, %v3410
    %v3412 = vmul.f32 %v3409, %v3411
    %v3413 = vadd.f32 %v3409, %v3412
    %vm3414 = vweird.f32 %v3388
    %vm3415 = vweird.f32 %v3409
    %vm3416 = vmor %vm3414, %vm3415
    %v3417 = vsel %vm3416, %v3409, %v3413
    %v3418 = vand.u32 2147483647, %v3388
    %vm3419 = vcmp.eq.f32.partialorder %v3418, 8.507059e+37
    %v3420 = vand.u32 %v3388, 2147483648
    %v3421 = vor.u32 1.1754944e-38, %v3420
    %v3422 = vsel %vm3419, %v3421, %v3417
    %v3423 = vmul.f32 1.0, %v3422
    %v3424 = vrcp.pop %v3389
    %v3425 = vmul.f32 %v3389, %v3424
    %v3426 = vsub.f32 1.0, %v3425
    %v3427 = vmul.f32 %v3424, %v3426
    %v3428 = vadd.f32 %v3424, %v3427
    %vm3429 = vweird.f32 %v3389
    %vm3430 = vweird.f32 %v3424
    %vm3431 = vmor %vm3429, %vm3430
    %v3432 = vsel %vm3431, %v3424, %v3428
    %v3433 = vand.u32 2147483647, %v3389
    %vm3434 = vcmp.eq.f32.partialorder %v3433, 8.507059e+37
    %v3435 = vand.u32 %v3389, 2147483648
    %v3436 = vor.u32 1.1754944e-38, %v3435
    %v3437 = vsel %vm3434, %v3436, %v3432
    %v3438 = vmul.f32 1.0, %v3437
    %v3439 = vrcp.pop %v3390
    %v3440 = vmul.f32 %v3390, %v3439
    %v3441 = vsub.f32 1.0, %v3440
    %v3442 = vmul.f32 %v3439, %v3441
    %v3443 = vadd.f32 %v3439, %v3442
    %vm3444 = vweird.f32 %v3390
    %vm3445 = vweird.f32 %v3439
    %vm3446 = vmor %vm3444, %vm3445
    %v3447 = vsel %vm3446, %v3439, %v3443
    %v3448 = vand.u32 2147483647, %v3390
    %vm3449 = vcmp.eq.f32.partialorder %v3448, 8.507059e+37
    %v3450 = vand.u32 %v3390, 2147483648
    %v3451 = vor.u32 1.1754944e-38, %v3450
    %v3452 = vsel %vm3449, %v3451, %v3447
    %v3453 = vmul.f32 1.0, %v3452
    %v3454 = vrcp.pop %v3391
    %v3455 = vmul.f32 %v3391, %v3454
    %v3456 = vsub.f32 1.0, %v3455
    %v3457 = vmul.f32 %v3454, %v3456
    %v3458 = vadd.f32 %v3454, %v3457
    %vm3459 = vweird.f32 %v3391
    %vm3460 = vweird.f32 %v3454
    %vm3461 = vmor %vm3459, %vm3460
    %v3462 = vsel %vm3461, %v3454, %v3458
    %v3463 = vand.u32 2147483647, %v3391
    %vm3464 = vcmp.eq.f32.partialorder %v3463, 8.507059e+37
    %v3465 = vand.u32 %v3391, 2147483648
    %v3466 = vor.u32 1.1754944e-38, %v3465
    %v3467 = vsel %vm3464, %v3466, %v3462
    %v3468 = vmul.f32 1.0, %v3467
    %v3469 = vrcp.pop %v3392
    %v3470 = vmul.f32 %v3392, %v3469
    %v3471 = vsub.f32 1.0, %v3470
    %v3472 = vmul.f32 %v3469, %v3471
    %v3473 = vadd.f32 %v3469, %v3472
    %vm3474 = vweird.f32 %v3392
    %vm3475 = vweird.f32 %v3469
    %vm3476 = vmor %vm3474, %vm3475
    %v3477 = vsel %vm3476, %v3469, %v3473
    %v3478 = vand.u32 2147483647, %v3392
    %vm3479 = vcmp.eq.f32.partialorder %v3478, 8.507059e+37
    %v3480 = vand.u32 %v3392, 2147483648
    %v3481 = vor.u32 1.1754944e-38, %v3480
    %v3482 = vsel %vm3479, %v3481, %v3477
    %v3483 = vmul.f32 1.0, %v3482
    %v3484 = vrcp.pop %v3393
    %v3485 = vmul.f32 %v3393, %v3484
    %v3486 = vsub.f32 1.0, %v3485
    %v3487 = vmul.f32 %v3484, %v3486
    %v3488 = vadd.f32 %v3484, %v3487
    %vm3489 = vweird.f32 %v3393
    %vm3490 = vweird.f32 %v3484
    %vm3491 = vmor %vm3489, %vm3490
    %v3492 = vsel %vm3491, %v3484, %v3488
    %v3493 = vand.u32 2147483647, %v3393
    %vm3494 = vcmp.eq.f32.partialorder %v3493, 8.507059e+37
    %v3495 = vand.u32 %v3393, 2147483648
    %v3496 = vor.u32 1.1754944e-38, %v3495
    %v3497 = vsel %vm3494, %v3496, %v3492
    %v3498 = vmul.f32 1.0, %v3497
    %v3499 = vpack.c.bf16 %v3423, %v3408
    %v3500 = vpack.c.bf16 %v3453, %v3438
    %v3501 = vpack.c.bf16 %v3483, %v3468
    %v3502 = vpack.c.bf16 %v3498, %v3498
    %3503 = vst [vmem:[#allocation2] sm:$0xff] %v3499
    %3504 = vst [vmem:[#allocation2 + $0x8] sm:$0xff] %v3500
    %3505 = vst [vmem:[#allocation2 + $0x10] sm:$0xff] %v3501
    %vm3506 = vcmask 125952
    %3507 = vst.msk [vmem:[#allocation2 + $0x18] sm:$0xf] %vm3506, %v3502
    %3508 = vst [vmem:[#allocation4] sm:$0xff] %v1748
    // Predicated region
    $region42: #{tpu_custom_call.1} parent=1 // pred_check
      _
    $region43: #{tpu_custom_call.1} parent=1 // pred_check_branch
      %3510 = sbr.rel (0) target = $region45
    $region44: #{tpu_custom_call.1} parent=1 // pred_region
      %3512 = vsyncadd [#allocation3], 0
      %s3514 = sshll.u32 [#allocation2], 4
      %s3515 = int_to_ptr.vmem [resolvable:$true] %s3514
      %s3516 = sshll.u32 %s10, 4
      %s3517 = int_to_ptr.hbm [resolvable:$true] %s3516
      %3519 = dma.vmem_to_hbm [thread:$0]  %s3515, 448, %s3517, [#allocation3]
    $region45: #{tpu_custom_call.1} parent=1 // pred_fallthru
      _
    // Predicated region
    $region46: #{tpu_custom_call.1} parent=1 // pred_check
      _
    $region47: #{tpu_custom_call.1} parent=1 // pred_check_branch
      %3521 = sbr.rel (0) target = $region49
    $region48: #{tpu_custom_call.1} parent=1 // pred_region
      %3523 = vsyncadd [#allocation5], 0
      %s3525 = sshll.u32 [#allocation4], 4
      %s3526 = int_to_ptr.vmem [resolvable:$true] %s3525
      %s3527 = sshll.u32 %s11, 4
      %s3528 = int_to_ptr.hbm [resolvable:$true] %s3527
      %3530 = dma.vmem_to_hbm [thread:$0]  %s3526, 128, %s3528, [#allocation5]
    $region49: #{tpu_custom_call.1} parent=1 // pred_fallthru
      _
    // Predicated region
    $region50: #{tpu_custom_call.1} parent=1 // pred_check
      _
    $region51: #{tpu_custom_call.1} parent=1 // pred_check_branch
      %3532 = sbr.rel (0) target = $region53
    $region52: #{tpu_custom_call.1} parent=1 // pred_region
      %3534 = dma.done [#allocation3], 448
    $region53: #{tpu_custom_call.1} parent=1 // pred_fallthru
      _
    // Predicated region
    $region54: #{tpu_custom_call.1} parent=1 // pred_check
      _
    $region55: #{tpu_custom_call.1} parent=1 // pred_check_branch
      %3536 = sbr.rel (0) target = $region57
    $region56: #{tpu_custom_call.1} parent=1 // pred_region
      %3538 = dma.done [#allocation5], 128
    $region57: #{tpu_custom_call.1} parent=1 // pred_fallthru
      _
    %3539 = vsyncpa [#allocation3], 1
    %3540 = vsyncpa [#allocation5], 1

</llo_original>
